<compile_context>
chip_gen: v6e
topology: v6e:2x2x1
jax: 0.10.0
libtpu: 0.0.40
codegen_flags: <defaults>
</compile_context>

<pallas_src>
import math
import functools

import jax
import jax.numpy as jnp
import numpy as np
from jax import lax
from jax.experimental import pallas as pl
from jax.experimental.pallas import tpu as pltpu

# ------------------------- config (small, synthetic) -------------------------
CFG = dict(
    emb_dim=32,
    hidden_dim=64,
    n_heads=4,
    context_length=16,
    dtype=jnp.float32,
)
EPS = 1e-5
NEG_INF = -1e30   # finite sentinel: avoids inf-inf -> NaN


# ------------------------------- RoPE tables ---------------------------------
def precompute_rope_params(head_dim, theta_base=10000.0, context_length=4096):
    assert head_dim % 2 == 0
    half = head_dim // 2
    inv_freq = 1.0 / theta_base ** (jnp.arange(0, half, dtype=jnp.float32) / half)
    positions = jnp.arange(context_length, dtype=jnp.float32)
    angles = positions[:, None] * inv_freq[None, :]          # (ctx, half)
    angles = jnp.concatenate([angles, angles], axis=1)        # (ctx, head_dim)
    return jnp.cos(angles), jnp.sin(angles)


# ------------------------------ Pallas kernel --------------------------------
def transformer_block_kernel(
    x_ref,        # (S, E)   one batch's row block, f32
    wqkv_ref,     # (E, 3E)  bf16  [Wq/sqrt(hd) | Wk | Wv]
    wo3_ref,      # (NH, hd, E) bf16  head-major Wo row blocks
    w12_ref,      # (E, 2H)  bf16  [W1 | W2]
    w3_ref,       # (H, E)   bf16
    n1_ref, n2_ref,      # (1, E) f32
    cos_ref, sin_ref,    # (S, hd) f32
    o_ref,        # (S, E)
    q_s, k_s, v_s,       # VMEM scratch (NH, S, hd) f32
    *, num_heads, head_dim,
):
    f32 = jnp.float32
    bf16 = jnp.bfloat16
    x = x_ref[...].astype(f32)                       # (S, E)
    S, E = x.shape
    H = w3_ref.shape[0]
    half = head_dim // 2

    def rmsnorm(v, w):
        ms = jnp.mean(v * v, axis=-1, keepdims=True)
        return v * lax.rsqrt(ms + EPS) * w

    n1 = n1_ref[...].astype(f32)
    n2 = n2_ref[...].astype(f32)
    cos_t = cos_ref[...]                             # (S, hd)
    sin_t = sin_ref[...]

    # ---------------- attention sub-block ------------------------------------
    xn = rmsnorm(x, n1)
    # fused QKV projection; bf16 MXU operands, f32 accumulation
    qkv = jnp.dot(xn.astype(bf16), wqkv_ref[...], preferred_element_type=f32)

    # RoPE rotate-half per head (static slices, done once), written to
    # head-major scratch so the head loop only does leading-dim indexing.
    for h in range(num_heads):
        lo = h * head_dim
        qh = qkv[:, lo:lo + head_dim]
        kh = qkv[:, E + lo:E + lo + head_dim]
        vh = qkv[:, 2 * E + lo:2 * E + lo + head_dim]
        q_rot = jnp.concatenate([-qh[:, half:], qh[:, :half]], axis=-1)
        k_rot = jnp.concatenate([-kh[:, half:], kh[:, :half]], axis=-1)
        q_s[h] = qh * cos_t + q_rot * sin_t
        k_s[h] = kh * cos_t + k_rot * sin_t
        v_s[h] = vh

    # additive causal mask, built once (loop-invariant)
    row = lax.broadcasted_iota(jnp.int32, (S, S), 0)
    col = lax.broadcasted_iota(jnp.int32, (S, S), 1)
    mask_add = jnp.where(col <= row, 0.0, NEG_INF).astype(f32)

    def head_body(h, acc):
        qh = q_s[h].astype(bf16)                     # (S, hd)
        kh = k_s[h].astype(bf16)
        # scale already folded into Wq host-side
        s = lax.dot_general(qh, kh, (((1,), (1,)), ((), ())),
                            preferred_element_type=f32) + mask_add   # (S, S)
        m = jnp.max(s, axis=-1, keepdims=True)
        e = jnp.exp(s - m)
        p = e * pl.reciprocal(jnp.sum(e, axis=-1, keepdims=True), approx=True)
        ctx = jnp.dot(p.astype(bf16), v_s[h].astype(bf16),
                      preferred_element_type=f32)    # (S, hd)
        # accumulate through the matching Wo row block (no head concat)
        return acc + jnp.dot(ctx.astype(bf16), wo3_ref[h],
                             preferred_element_type=f32)             # (S, E)

    attn = lax.fori_loop(0, num_heads, head_body, jnp.zeros((S, E), f32))
    x1 = attn + x

    # ---------------- SwiGLU feed-forward sub-block ---------------------------
    xn2 = rmsnorm(x1, n2)
    h12 = jnp.dot(xn2.astype(bf16), w12_ref[...], preferred_element_type=f32)
    h1 = h12[:, :H]
    h2 = h12[:, H:]
    ff = jnp.dot((h1 * jax.nn.sigmoid(h1) * h2).astype(bf16), w3_ref[...],
                 preferred_element_type=f32)                          # (S, E)

    o_ref[...] = (ff + x1).astype(o_ref.dtype)


# --------------------------------- wrapper -----------------------------------
def transformer_block(x, params, cos, sin, num_heads):
    B, S, E = x.shape
    head_dim = E // num_heads
    H = params["w3"].shape[0]
    bf16 = jnp.bfloat16
    scale = 1.0 / math.sqrt(head_dim)

    # --- one-time host-side param packing -------------------------------------
    # scale folded into Wq (RoPE commutes with scaling); weights cast to bf16.
    w_qkv = jnp.concatenate(
        [params["wq"] * scale, params["wk"], params["wv"]], axis=1).astype(bf16)
    wo3 = params["wo"].reshape(num_heads, head_dim, E).astype(bf16)
    w12 = jnp.concatenate([params["w1"], params["w2"]], axis=1).astype(bf16)
    w3 = params["w3"].astype(bf16)
    cos_s = cos[:S].astype(jnp.float32)              # (S, hd) — no B/head tiling
    sin_s = sin[:S].astype(jnp.float32)
    x2 = x.reshape(B * S, E)

    kernel = functools.partial(
        transformer_block_kernel, num_heads=num_heads, head_dim=head_dim)

    def full(shape):
        return pl.BlockSpec(shape, lambda b, _n=len(shape): (0,) * _n)

    y = pl.pallas_call(
        kernel,
        out_shape=jax.ShapeDtypeStruct((B * S, E), x.dtype),
        grid=(B,),
        in_specs=[
            pl.BlockSpec((S, E), lambda b: (b, 0)),          # x: per-batch rows
            full((E, 3 * E)),                                # fused QKV weights
            full((num_heads, head_dim, E)),                  # Wo (head-major)
            full((E, 2 * H)),                                # fused gate/up
            full((H, E)),                                    # down proj
            full((1, E)), full((1, E)),                      # norm weights
            full((S, head_dim)), full((S, head_dim)),        # cos / sin
        ],
        out_specs=pl.BlockSpec((S, E), lambda b: (b, 0)),
        scratch_shapes=[pltpu.VMEM((num_heads, S, head_dim), jnp.float32)] * 3,
        compiler_params=pltpu.CompilerParams(
            dimension_semantics=("parallel",)),              # shard batches over TCs
    )(x2, w_qkv, wo3, w12, w3, params["n1"], params["n2"], cos_s, sin_s)
    return y.reshape(B, S, E)


# --------------------------- pure-JAX reference -------------------------------
def reference_block(x, params, cos, sin, num_heads):
    B, S, E = x.shape
    head_dim = E // num_heads

    def rmsnorm(v, w):
        means = jnp.mean(v * v, axis=-1, keepdims=True)
        return v * lax.rsqrt(means + EPS) * w[0]

    def rope(t):  # (B, nh, S, hd)
        half = head_dim // 2
        t1, t2 = t[..., :half], t[..., half:]
        rot = jnp.concatenate([-t2, t1], axis=-1)
        return t * cos[None, None] + rot * sin[None, None]

    shortcut = x
    xn = rmsnorm(x, params["n1"])
    q = (xn @ params["wq"]).reshape(B, S, num_heads, head_dim).transpose(0, 2, 1, 3)
    k = (xn @ params["wk"]).reshape(B, S, num_heads, head_dim).transpose(0, 2, 1, 3)
    v = (xn @ params["wv"]).reshape(B, S, num_heads, head_dim).transpose(0, 2, 1, 3)
    q, k = rope(q), rope(k)
    s = jnp.einsum("bhqd,bhkd->bhqk", q, k) / math.sqrt(head_dim)
    mask = jnp.triu(jnp.ones((S, S), bool), 1)
    s = jnp.where(mask[None, None], -jnp.inf, s)
    p = jax.nn.softmax(s, axis=-1)
    ctx = jnp.einsum("bhqk,bhkd->bhqd", p, v).transpose(0, 2, 1, 3).reshape(B, S, E)
    x1 = ctx @ params["wo"] + shortcut

    xn2 = rmsnorm(x1, params["n2"])
    h1 = xn2 @ params["w1"]
    h2 = xn2 @ params["w2"]
    ff = (h1 * jax.nn.sigmoid(h1) * h2) @ params["w3"]
    return ff + x1


# ----------------------------------- main -------------------------------------
if __name__ == "__main__":
    E, H, NH, CTX = CFG["emb_dim"], CFG["hidden_dim"], CFG["n_heads"], CFG["context_length"]
    B, S = 2, 8
    head_dim = E // NH

    key = jax.random.PRNGKey(0)
    ks = jax.random.split(key, 9)
    init = lambda k, shape: jax.random.normal(k, shape, jnp.float32) * 0.02

    params = dict(
        wq=init(ks[0], (E, E)), wk=init(ks[1], (E, E)),
        wv=init(ks[2], (E, E)), wo=init(ks[3], (E, E)),
        w1=init(ks[4], (E, H)), w2=init(ks[5], (E, H)),
        w3=init(ks[6], (H, E)),
        n1=jnp.ones((1, E), jnp.float32),
        n2=jnp.ones((1, E), jnp.float32),
    )

    cos_full, sin_full = precompute_rope_params(head_dim, context_length=CTX)
    cos, sin = cos_full[:S], sin_full[:S]

    x = jax.random.normal(ks[7], (B, S, E), jnp.float32)

    out = transformer_block(x, params, cos, sin, NH)
    out = jax.block_until_ready(out)

    ref = reference_block(x, params, cos, sin, NH)
    # bf16 MXU operands + approx-EUP softmax reciprocal -> slightly relaxed tol
    np.testing.assert_allclose(np.asarray(out), np.asarray(ref), rtol=2e-3, atol=2e-3)

    print("KERNEL_OK")
</pallas_src>

<mosaic_0001>
module attributes {stable_mosaic.version = 11 : i64} {
  func.func @transformer_block_kernel(%arg0: i32, %arg1: memref<8x32xf32, #tpu.memory_space<vmem>>, %arg2: memref<32x96xbf16, #tpu.memory_space<vmem>>, %arg3: memref<4x8x32xbf16, #tpu.memory_space<vmem>>, %arg4: memref<32x128xbf16, #tpu.memory_space<vmem>>, %arg5: memref<64x32xbf16, #tpu.memory_space<vmem>>, %arg6: memref<1x32xf32, #tpu.memory_space<vmem>>, %arg7: memref<1x32xf32, #tpu.memory_space<vmem>>, %arg8: memref<8x8xf32, #tpu.memory_space<vmem>>, %arg9: memref<8x8xf32, #tpu.memory_space<vmem>>, %arg10: memref<8x32xf32, #tpu.memory_space<vmem>>, %arg11: memref<4x8x8xf32, #tpu.memory_space<vmem>>, %arg12: memref<4x8x8xf32, #tpu.memory_space<vmem>>, %arg13: memref<4x8x8xf32, #tpu.memory_space<vmem>>) attributes {dimension_semantics = [#tpu.dimension_semantics<parallel>], iteration_bounds = array<i64: 2>, scalar_prefetch = 0 : i64, scratch_operands = 3 : i64, tpu.core_type = #tpu.core_type<tc>, window_params = [{transform_indices = @transform_0, window_bounds = array<i64: 8, 32>}, {pipeline_mode = #tpu.pipeline_mode<synchronous>, transform_indices = @transform_1, window_bounds = array<i64: 32, 96>}, {pipeline_mode = #tpu.pipeline_mode<synchronous>, transform_indices = @transform_2, window_bounds = array<i64: 4, 8, 32>}, {pipeline_mode = #tpu.pipeline_mode<synchronous>, transform_indices = @transform_3, window_bounds = array<i64: 32, 128>}, {pipeline_mode = #tpu.pipeline_mode<synchronous>, transform_indices = @transform_4, window_bounds = array<i64: 64, 32>}, {pipeline_mode = #tpu.pipeline_mode<synchronous>, transform_indices = @transform_5, window_bounds = array<i64: 1, 32>}, {pipeline_mode = #tpu.pipeline_mode<synchronous>, transform_indices = @transform_6, window_bounds = array<i64: 1, 32>}, {pipeline_mode = #tpu.pipeline_mode<synchronous>, transform_indices = @transform_7, window_bounds = array<i64: 8, 8>}, {pipeline_mode = #tpu.pipeline_mode<synchronous>, transform_indices = @transform_8, window_bounds = array<i64: 8, 8>}, {transform_indices = @transform_9, window_bounds = array<i64: 8, 32>}]} {
    %c0 = arith.constant 0 : index
    %c0_0 = arith.constant 0 : index
    %0 = vector.load %arg1[%c0, %c0_0] : memref<8x32xf32, #tpu.memory_space<vmem>>, vector<8x32xf32>
    %c0_1 = arith.constant 0 : index
    %c0_2 = arith.constant 0 : index
    %1 = vector.load %arg6[%c0_1, %c0_2] : memref<1x32xf32, #tpu.memory_space<vmem>>, vector<1x32xf32>
    %c0_3 = arith.constant 0 : index
    %c0_4 = arith.constant 0 : index
    %2 = vector.load %arg7[%c0_3, %c0_4] : memref<1x32xf32, #tpu.memory_space<vmem>>, vector<1x32xf32>
    %c0_5 = arith.constant 0 : index
    %c0_6 = arith.constant 0 : index
    %3 = vector.load %arg8[%c0_5, %c0_6] : memref<8x8xf32, #tpu.memory_space<vmem>>, vector<8x8xf32>
    %c0_7 = arith.constant 0 : index
    %c0_8 = arith.constant 0 : index
    %4 = vector.load %arg9[%c0_7, %c0_8] : memref<8x8xf32, #tpu.memory_space<vmem>>, vector<8x8xf32>
    %5 = arith.mulf %0, %0 : vector<8x32xf32>
    %cst = arith.constant dense<0.000000e+00> : vector<8xf32>
    %6 = vector.multi_reduction <add>, %5, %cst [1] : vector<8x32xf32> to vector<8xf32>
    %7 = vector.shape_cast %6 : vector<8xf32> to vector<8x1xf32>
    %cst_9 = arith.constant 3.200000e+01 : f32
    %8 = vector.broadcast %cst_9 : f32 to vector<8x1xf32>
    %9 = arith.divf %7, %8 : vector<8x1xf32>
    %cst_10 = arith.constant 9.99999974E-6 : f32
    %10 = vector.broadcast %cst_10 : f32 to vector<8x1xf32>
    %11 = arith.addf %9, %10 : vector<8x1xf32>
    %12 = math.rsqrt %11 : vector<8x1xf32>
    %13 = vector.broadcast %12 : vector<8x1xf32> to vector<8x32xf32>
    %14 = arith.mulf %0, %13 : vector<8x32xf32>
    %15 = vector.broadcast %1 : vector<1x32xf32> to vector<8x32xf32>
    %16 = arith.mulf %14, %15 : vector<8x32xf32>
    %17 = arith.truncf %16 : vector<8x32xf32> to vector<8x32xbf16>
    %c0_11 = arith.constant 0 : index
    %c0_12 = arith.constant 0 : index
    %18 = vector.load %arg2[%c0_11, %c0_12] : memref<32x96xbf16, #tpu.memory_space<vmem>>, vector<32x96xbf16>
    %cst_13 = arith.constant dense<0.000000e+00> : vector<8x96xf32>
    %19 = tpu.matmul %17, %18, %cst_13 {dimension_numbers = #tpu.dot_dimension_numbers<[1], [0], [0], [1], [0, 0, 1, 1], [], []>} : vector<8x32xbf16>, vector<32x96xbf16>, vector<8x96xf32> -> vector<8x96xf32>
    %20 = vector.extract_strided_slice %19 {offsets = [0, 0], sizes = [8, 8], strides = [1, 1]} : vector<8x96xf32> to vector<8x8xf32>
    %21 = vector.extract_strided_slice %19 {offsets = [0, 32], sizes = [8, 8], strides = [1, 1]} : vector<8x96xf32> to vector<8x8xf32>
    %22 = vector.extract_strided_slice %19 {offsets = [0, 64], sizes = [8, 8], strides = [1, 1]} : vector<8x96xf32> to vector<8x8xf32>
    %23 = vector.extract_strided_slice %20 {offsets = [0, 4], sizes = [8, 4], strides = [1, 1]} : vector<8x8xf32> to vector<8x4xf32>
    %cst_14 = arith.constant 0.000000e+00 : f32
    %24 = vector.broadcast %cst_14 : f32 to vector<8x4xf32>
    %25 = arith.subf %24, %23 : vector<8x4xf32>
    %26 = vector.extract_strided_slice %20 {offsets = [0, 0], sizes = [8, 4], strides = [1, 1]} : vector<8x8xf32> to vector<8x4xf32>
    %27 = tpu.concatenate %25, %26 in 1 : vector<8x4xf32>, vector<8x4xf32> -> vector<8x8xf32>
    %28 = vector.extract_strided_slice %21 {offsets = [0, 4], sizes = [8, 4], strides = [1, 1]} : vector<8x8xf32> to vector<8x4xf32>
    %cst_15 = arith.constant 0.000000e+00 : f32
    %29 = vector.broadcast %cst_15 : f32 to vector<8x4xf32>
    %30 = arith.subf %29, %28 : vector<8x4xf32>
    %31 = vector.extract_strided_slice %21 {offsets = [0, 0], sizes = [8, 4], strides = [1, 1]} : vector<8x8xf32> to vector<8x4xf32>
    %32 = tpu.concatenate %30, %31 in 1 : vector<8x4xf32>, vector<8x4xf32> -> vector<8x8xf32>
    %33 = arith.mulf %20, %3 : vector<8x8xf32>
    %34 = arith.mulf %27, %4 : vector<8x8xf32>
    %35 = arith.addf %33, %34 : vector<8x8xf32>
    %c0_16 = arith.constant 0 : index
    %c0_17 = arith.constant 0 : index
    %c0_18 = arith.constant 0 : index
    %36 = vector.load %arg11[%c0_16, %c0_17, %c0_18] : memref<4x8x8xf32, #tpu.memory_space<vmem>>, vector<1x8x8xf32>
    %37 = vector.shape_cast %36 : vector<1x8x8xf32> to vector<8x8xf32>
    %38 = vector.shape_cast %35 : vector<8x8xf32> to vector<1x8x8xf32>
    tpu.vector_store %arg11[%c0_16, %c0_17, %c0_18], %38 {strides = array<i32>} : memref<4x8x8xf32, #tpu.memory_space<vmem>>, vector<1x8x8xf32>,
    %39 = arith.mulf %21, %3 : vector<8x8xf32>
    %40 = arith.mulf %32, %4 : vector<8x8xf32>
    %41 = arith.addf %39, %40 : vector<8x8xf32>
    %c0_19 = arith.constant 0 : index
    %c0_20 = arith.constant 0 : index
    %c0_21 = arith.constant 0 : index
    %42 = vector.load %arg12[%c0_19, %c0_20, %c0_21] : memref<4x8x8xf32, #tpu.memory_space<vmem>>, vector<1x8x8xf32>
    %43 = vector.shape_cast %42 : vector<1x8x8xf32> to vector<8x8xf32>
    %44 = vector.shape_cast %41 : vector<8x8xf32> to vector<1x8x8xf32>
    tpu.vector_store %arg12[%c0_19, %c0_20, %c0_21], %44 {strides = array<i32>} : memref<4x8x8xf32, #tpu.memory_space<vmem>>, vector<1x8x8xf32>,
    %c0_22 = arith.constant 0 : index
    %c0_23 = arith.constant 0 : index
    %c0_24 = arith.constant 0 : index
    %45 = vector.load %arg13[%c0_22, %c0_23, %c0_24] : memref<4x8x8xf32, #tpu.memory_space<vmem>>, vector<1x8x8xf32>
    %46 = vector.shape_cast %45 : vector<1x8x8xf32> to vector<8x8xf32>
    %47 = vector.shape_cast %22 : vector<8x8xf32> to vector<1x8x8xf32>
    tpu.vector_store %arg13[%c0_22, %c0_23, %c0_24], %47 {strides = array<i32>} : memref<4x8x8xf32, #tpu.memory_space<vmem>>, vector<1x8x8xf32>,
    %48 = vector.extract_strided_slice %19 {offsets = [0, 8], sizes = [8, 8], strides = [1, 1]} : vector<8x96xf32> to vector<8x8xf32>
    %49 = vector.extract_strided_slice %19 {offsets = [0, 40], sizes = [8, 8], strides = [1, 1]} : vector<8x96xf32> to vector<8x8xf32>
    %50 = vector.extract_strided_slice %19 {offsets = [0, 72], sizes = [8, 8], strides = [1, 1]} : vector<8x96xf32> to vector<8x8xf32>
    %51 = vector.extract_strided_slice %48 {offsets = [0, 4], sizes = [8, 4], strides = [1, 1]} : vector<8x8xf32> to vector<8x4xf32>
    %cst_25 = arith.constant 0.000000e+00 : f32
    %52 = vector.broadcast %cst_25 : f32 to vector<8x4xf32>
    %53 = arith.subf %52, %51 : vector<8x4xf32>
    %54 = vector.extract_strided_slice %48 {offsets = [0, 0], sizes = [8, 4], strides = [1, 1]} : vector<8x8xf32> to vector<8x4xf32>
    %55 = tpu.concatenate %53, %54 in 1 : vector<8x4xf32>, vector<8x4xf32> -> vector<8x8xf32>
    %56 = vector.extract_strided_slice %49 {offsets = [0, 4], sizes = [8, 4], strides = [1, 1]} : vector<8x8xf32> to vector<8x4xf32>
    %cst_26 = arith.constant 0.000000e+00 : f32
    %57 = vector.broadcast %cst_26 : f32 to vector<8x4xf32>
    %58 = arith.subf %57, %56 : vector<8x4xf32>
    %59 = vector.extract_strided_slice %49 {offsets = [0, 0], sizes = [8, 4], strides = [1, 1]} : vector<8x8xf32> to vector<8x4xf32>
    %60 = tpu.concatenate %58, %59 in 1 : vector<8x4xf32>, vector<8x4xf32> -> vector<8x8xf32>
    %61 = arith.mulf %48, %3 : vector<8x8xf32>
    %62 = arith.mulf %55, %4 : vector<8x8xf32>
    %63 = arith.addf %61, %62 : vector<8x8xf32>
    %c1 = arith.constant 1 : index
    %c0_27 = arith.constant 0 : index
    %c0_28 = arith.constant 0 : index
    %64 = vector.load %arg11[%c1, %c0_27, %c0_28] : memref<4x8x8xf32, #tpu.memory_space<vmem>>, vector<1x8x8xf32>
    %65 = vector.shape_cast %64 : vector<1x8x8xf32> to vector<8x8xf32>
    %66 = vector.shape_cast %63 : vector<8x8xf32> to vector<1x8x8xf32>
    tpu.vector_store %arg11[%c1, %c0_27, %c0_28], %66 {strides = array<i32>} : memref<4x8x8xf32, #tpu.memory_space<vmem>>, vector<1x8x8xf32>,
    %67 = arith.mulf %49, %3 : vector<8x8xf32>
    %68 = arith.mulf %60, %4 : vector<8x8xf32>
    %69 = arith.addf %67, %68 : vector<8x8xf32>
    %c1_29 = arith.constant 1 : index
    %c0_30 = arith.constant 0 : index
    %c0_31 = arith.constant 0 : index
    %70 = vector.load %arg12[%c1_29, %c0_30, %c0_31] : memref<4x8x8xf32, #tpu.memory_space<vmem>>, vector<1x8x8xf32>
    %71 = vector.shape_cast %70 : vector<1x8x8xf32> to vector<8x8xf32>
    %72 = vector.shape_cast %69 : vector<8x8xf32> to vector<1x8x8xf32>
    tpu.vector_store %arg12[%c1_29, %c0_30, %c0_31], %72 {strides = array<i32>} : memref<4x8x8xf32, #tpu.memory_space<vmem>>, vector<1x8x8xf32>,
    %c1_32 = arith.constant 1 : index
    %c0_33 = arith.constant 0 : index
    %c0_34 = arith.constant 0 : index
    %73 = vector.load %arg13[%c1_32, %c0_33, %c0_34] : memref<4x8x8xf32, #tpu.memory_space<vmem>>, vector<1x8x8xf32>
    %74 = vector.shape_cast %73 : vector<1x8x8xf32> to vector<8x8xf32>
    %75 = vector.shape_cast %50 : vector<8x8xf32> to vector<1x8x8xf32>
    tpu.vector_store %arg13[%c1_32, %c0_33, %c0_34], %75 {strides = array<i32>} : memref<4x8x8xf32, #tpu.memory_space<vmem>>, vector<1x8x8xf32>,
    %76 = vector.extract_strided_slice %19 {offsets = [0, 16], sizes = [8, 8], strides = [1, 1]} : vector<8x96xf32> to vector<8x8xf32>
    %77 = vector.extract_strided_slice %19 {offsets = [0, 48], sizes = [8, 8], strides = [1, 1]} : vector<8x96xf32> to vector<8x8xf32>
    %78 = vector.extract_strided_slice %19 {offsets = [0, 80], sizes = [8, 8], strides = [1, 1]} : vector<8x96xf32> to vector<8x8xf32>
    %79 = vector.extract_strided_slice %76 {offsets = [0, 4], sizes = [8, 4], strides = [1, 1]} : vector<8x8xf32> to vector<8x4xf32>
    %cst_35 = arith.constant 0.000000e+00 : f32
    %80 = vector.broadcast %cst_35 : f32 to vector<8x4xf32>
    %81 = arith.subf %80, %79 : vector<8x4xf32>
    %82 = vector.extract_strided_slice %76 {offsets = [0, 0], sizes = [8, 4], strides = [1, 1]} : vector<8x8xf32> to vector<8x4xf32>
    %83 = tpu.concatenate %81, %82 in 1 : vector<8x4xf32>, vector<8x4xf32> -> vector<8x8xf32>
    %84 = vector.extract_strided_slice %77 {offsets = [0, 4], sizes = [8, 4], strides = [1, 1]} : vector<8x8xf32> to vector<8x4xf32>
    %cst_36 = arith.constant 0.000000e+00 : f32
    %85 = vector.broadcast %cst_36 : f32 to vector<8x4xf32>
    %86 = arith.subf %85, %84 : vector<8x4xf32>
    %87 = vector.extract_strided_slice %77 {offsets = [0, 0], sizes = [8, 4], strides = [1, 1]} : vector<8x8xf32> to vector<8x4xf32>
    %88 = tpu.concatenate %86, %87 in 1 : vector<8x4xf32>, vector<8x4xf32> -> vector<8x8xf32>
    %89 = arith.mulf %76, %3 : vector<8x8xf32>
    %90 = arith.mulf %83, %4 : vector<8x8xf32>
    %91 = arith.addf %89, %90 : vector<8x8xf32>
    %c2 = arith.constant 2 : index
    %c0_37 = arith.constant 0 : index
    %c0_38 = arith.constant 0 : index
    %92 = vector.load %arg11[%c2, %c0_37, %c0_38] : memref<4x8x8xf32, #tpu.memory_space<vmem>>, vector<1x8x8xf32>
    %93 = vector.shape_cast %92 : vector<1x8x8xf32> to vector<8x8xf32>
    %94 = vector.shape_cast %91 : vector<8x8xf32> to vector<1x8x8xf32>
    tpu.vector_store %arg11[%c2, %c0_37, %c0_38], %94 {strides = array<i32>} : memref<4x8x8xf32, #tpu.memory_space<vmem>>, vector<1x8x8xf32>,
    %95 = arith.mulf %77, %3 : vector<8x8xf32>
    %96 = arith.mulf %88, %4 : vector<8x8xf32>
    %97 = arith.addf %95, %96 : vector<8x8xf32>
    %c2_39 = arith.constant 2 : index
    %c0_40 = arith.constant 0 : index
    %c0_41 = arith.constant 0 : index
    %98 = vector.load %arg12[%c2_39, %c0_40, %c0_41] : memref<4x8x8xf32, #tpu.memory_space<vmem>>, vector<1x8x8xf32>
    %99 = vector.shape_cast %98 : vector<1x8x8xf32> to vector<8x8xf32>
    %100 = vector.shape_cast %97 : vector<8x8xf32> to vector<1x8x8xf32>
    tpu.vector_store %arg12[%c2_39, %c0_40, %c0_41], %100 {strides = array<i32>} : memref<4x8x8xf32, #tpu.memory_space<vmem>>, vector<1x8x8xf32>,
    %c2_42 = arith.constant 2 : index
    %c0_43 = arith.constant 0 : index
    %c0_44 = arith.constant 0 : index
    %101 = vector.load %arg13[%c2_42, %c0_43, %c0_44] : memref<4x8x8xf32, #tpu.memory_space<vmem>>, vector<1x8x8xf32>
    %102 = vector.shape_cast %101 : vector<1x8x8xf32> to vector<8x8xf32>
    %103 = vector.shape_cast %78 : vector<8x8xf32> to vector<1x8x8xf32>
    tpu.vector_store %arg13[%c2_42, %c0_43, %c0_44], %103 {strides = array<i32>} : memref<4x8x8xf32, #tpu.memory_space<vmem>>, vector<1x8x8xf32>,
    %104 = vector.extract_strided_slice %19 {offsets = [0, 24], sizes = [8, 8], strides = [1, 1]} : vector<8x96xf32> to vector<8x8xf32>
    %105 = vector.extract_strided_slice %19 {offsets = [0, 56], sizes = [8, 8], strides = [1, 1]} : vector<8x96xf32> to vector<8x8xf32>
    %106 = vector.extract_strided_slice %19 {offsets = [0, 88], sizes = [8, 8], strides = [1, 1]} : vector<8x96xf32> to vector<8x8xf32>
    %107 = vector.extract_strided_slice %104 {offsets = [0, 4], sizes = [8, 4], strides = [1, 1]} : vector<8x8xf32> to vector<8x4xf32>
    %cst_45 = arith.constant 0.000000e+00 : f32
    %108 = vector.broadcast %cst_45 : f32 to vector<8x4xf32>
    %109 = arith.subf %108, %107 : vector<8x4xf32>
    %110 = vector.extract_strided_slice %104 {offsets = [0, 0], sizes = [8, 4], strides = [1, 1]} : vector<8x8xf32> to vector<8x4xf32>
    %111 = tpu.concatenate %109, %110 in 1 : vector<8x4xf32>, vector<8x4xf32> -> vector<8x8xf32>
    %112 = vector.extract_strided_slice %105 {offsets = [0, 4], sizes = [8, 4], strides = [1, 1]} : vector<8x8xf32> to vector<8x4xf32>
    %cst_46 = arith.constant 0.000000e+00 : f32
    %113 = vector.broadcast %cst_46 : f32 to vector<8x4xf32>
    %114 = arith.subf %113, %112 : vector<8x4xf32>
    %115 = vector.extract_strided_slice %105 {offsets = [0, 0], sizes = [8, 4], strides = [1, 1]} : vector<8x8xf32> to vector<8x4xf32>
    %116 = tpu.concatenate %114, %115 in 1 : vector<8x4xf32>, vector<8x4xf32> -> vector<8x8xf32>
    %117 = arith.mulf %104, %3 : vector<8x8xf32>
    %118 = arith.mulf %111, %4 : vector<8x8xf32>
    %119 = arith.addf %117, %118 : vector<8x8xf32>
    %c3 = arith.constant 3 : index
    %c0_47 = arith.constant 0 : index
    %c0_48 = arith.constant 0 : index
    %120 = vector.load %arg11[%c3, %c0_47, %c0_48] : memref<4x8x8xf32, #tpu.memory_space<vmem>>, vector<1x8x8xf32>
    %121 = vector.shape_cast %120 : vector<1x8x8xf32> to vector<8x8xf32>
    %122 = vector.shape_cast %119 : vector<8x8xf32> to vector<1x8x8xf32>
    tpu.vector_store %arg11[%c3, %c0_47, %c0_48], %122 {strides = array<i32>} : memref<4x8x8xf32, #tpu.memory_space<vmem>>, vector<1x8x8xf32>,
    %123 = arith.mulf %105, %3 : vector<8x8xf32>
    %124 = arith.mulf %116, %4 : vector<8x8xf32>
    %125 = arith.addf %123, %124 : vector<8x8xf32>
    %c3_49 = arith.constant 3 : index
    %c0_50 = arith.constant 0 : index
    %c0_51 = arith.constant 0 : index
    %126 = vector.load %arg12[%c3_49, %c0_50, %c0_51] : memref<4x8x8xf32, #tpu.memory_space<vmem>>, vector<1x8x8xf32>
    %127 = vector.shape_cast %126 : vector<1x8x8xf32> to vector<8x8xf32>
    %128 = vector.shape_cast %125 : vector<8x8xf32> to vector<1x8x8xf32>
    tpu.vector_store %arg12[%c3_49, %c0_50, %c0_51], %128 {strides = array<i32>} : memref<4x8x8xf32, #tpu.memory_space<vmem>>, vector<1x8x8xf32>,
    %c3_52 = arith.constant 3 : index
    %c0_53 = arith.constant 0 : index
    %c0_54 = arith.constant 0 : index
    %129 = vector.load %arg13[%c3_52, %c0_53, %c0_54] : memref<4x8x8xf32, #tpu.memory_space<vmem>>, vector<1x8x8xf32>
    %130 = vector.shape_cast %129 : vector<1x8x8xf32> to vector<8x8xf32>
    %131 = vector.shape_cast %106 : vector<8x8xf32> to vector<1x8x8xf32>
    tpu.vector_store %arg13[%c3_52, %c0_53, %c0_54], %131 {strides = array<i32>} : memref<4x8x8xf32, #tpu.memory_space<vmem>>, vector<1x8x8xf32>,
    %132 = tpu.iota {dimensions = array<i32: 0>} : vector<8x8xi32>
    %133 = tpu.iota {dimensions = array<i32: 1>} : vector<8x8xi32>
    %134 = arith.cmpi sle, %133, %132 : vector<8x8xi32>
    %cst_55 = arith.constant 0.000000e+00 : f32
    %cst_56 = arith.constant -1.000000e+30 : f32
    %135 = vector.broadcast %cst_55 : f32 to vector<8x8xf32>
    %136 = vector.broadcast %cst_56 : f32 to vector<8x8xf32>
    %137 = arith.select %134, %135, %136 : vector<8x8xi1>, vector<8x8xf32>
    %cst_57 = arith.constant 0.000000e+00 : f32
    %138 = vector.broadcast %cst_57 : f32 to vector<8x32xf32>
    %c0_i32 = arith.constant 0 : i32
    %c4_i32 = arith.constant 4 : i32
    %139 = arith.addi %c0_i32, %c4_i32 : i32
    %c1_i32 = arith.constant 1 : i32
    %140 = scf.for %arg14 = %c0_i32 to %139 step %c1_i32 iter_args(%arg15 = %138) -> (vector<8x32xf32>)  : i32 {
      %171 = arith.index_cast %arg14 : i32 to index
      %c0_71 = arith.constant 0 : index
      %c0_72 = arith.constant 0 : index
      %172 = vector.load %arg11[%171, %c0_71, %c0_72] : memref<4x8x8xf32, #tpu.memory_space<vmem>>, vector<1x8x8xf32>
      %173 = vector.shape_cast %172 : vector<1x8x8xf32> to vector<8x8xf32>
      %174 = arith.truncf %173 : vector<8x8xf32> to vector<8x8xbf16>
      %175 = arith.index_cast %arg14 : i32 to index
      %c0_73 = arith.constant 0 : index
      %c0_74 = arith.constant 0 : index
      %176 = vector.load %arg12[%175, %c0_73, %c0_74] : memref<4x8x8xf32, #tpu.memory_space<vmem>>, vector<1x8x8xf32>
      %177 = vector.shape_cast %176 : vector<1x8x8xf32> to vector<8x8xf32>
      %178 = arith.truncf %177 : vector<8x8xf32> to vector<8x8xbf16>
      %cst_75 = arith.constant dense<0.000000e+00> : vector<8x8xf32>
      %179 = tpu.matmul %174, %178, %cst_75 {dimension_numbers = #tpu.dot_dimension_numbers<[1], [1], [0], [0], [0, 0, 1, 0], [], []>} : vector<8x8xbf16>, vector<8x8xbf16>, vector<8x8xf32> -> vector<8x8xf32>
      %180 = arith.addf %179, %137 : vector<8x8xf32>
      %cst_76 = arith.constant dense<0xFF800000> : vector<8xf32>
      %181 = vector.multi_reduction <maximumf>, %180, %cst_76 [1] : vector<8x8xf32> to vector<8xf32>
      %182 = vector.shape_cast %181 : vector<8xf32> to vector<8x1xf32>
      %183 = vector.broadcast %182 : vector<8x1xf32> to vector<8x8xf32>
      %184 = arith.subf %180, %183 : vector<8x8xf32>
      %185 = math.exp %184 : vector<8x8xf32>
      %cst_77 = arith.constant dense<0.000000e+00> : vector<8xf32>
      %186 = vector.multi_reduction <add>, %185, %cst_77 [1] : vector<8x8xf32> to vector<8xf32>
      %187 = vector.shape_cast %186 : vector<8xf32> to vector<8x1xf32>
      %188 = tpu.reciprocal %187 {approx = true} : vector<8x1xf32> -> vector<8x1xf32>
      %189 = vector.broadcast %188 : vector<8x1xf32> to vector<8x8xf32>
      %190 = arith.mulf %185, %189 : vector<8x8xf32>
      %191 = arith.truncf %190 : vector<8x8xf32> to vector<8x8xbf16>
      %192 = arith.index_cast %arg14 : i32 to index
      %c0_78 = arith.constant 0 : index
      %c0_79 = arith.constant 0 : index
      %193 = vector.load %arg13[%192, %c0_78, %c0_79] : memref<4x8x8xf32, #tpu.memory_space<vmem>>, vector<1x8x8xf32>
      %194 = vector.shape_cast %193 : vector<1x8x8xf32> to vector<8x8xf32>
      %195 = arith.truncf %194 : vector<8x8xf32> to vector<8x8xbf16>
      %cst_80 = arith.constant dense<0.000000e+00> : vector<8x8xf32>
      %196 = tpu.matmul %191, %195, %cst_80 {dimension_numbers = #tpu.dot_dimension_numbers<[1], [0], [0], [1], [0, 0, 1, 1], [], []>} : vector<8x8xbf16>, vector<8x8xbf16>, vector<8x8xf32> -> vector<8x8xf32>
      %197 = arith.truncf %196 : vector<8x8xf32> to vector<8x8xbf16>
      %198 = arith.index_cast %arg14 : i32 to index
      %c0_81 = arith.constant 0 : index
      %c0_82 = arith.constant 0 : index
      %199 = vector.load %arg3[%198, %c0_81, %c0_82] : memref<4x8x32xbf16, #tpu.memory_space<vmem>>, vector<1x8x32xbf16>
      %200 = vector.shape_cast %199 : vector<1x8x32xbf16> to vector<8x32xbf16>
      %cst_83 = arith.constant dense<0.000000e+00> : vector<8x32xf32>
      %201 = tpu.matmul %197, %200, %cst_83 {dimension_numbers = #tpu.dot_dimension_numbers<[1], [0], [0], [1], [0, 0, 1, 1], [], []>} : vector<8x8xbf16>, vector<8x32xbf16>, vector<8x32xf32> -> vector<8x32xf32>
      %202 = arith.addf %arg15, %201 : vector<8x32xf32>
      scf.yield %202 : vector<8x32xf32>
    }
    %c4_i32_58 = arith.constant 4 : i32
    %141 = arith.addf %140, %0 : vector<8x32xf32>
    %142 = arith.mulf %141, %141 : vector<8x32xf32>
    %cst_59 = arith.constant dense<0.000000e+00> : vector<8xf32>
    %143 = vector.multi_reduction <add>, %142, %cst_59 [1] : vector<8x32xf32> to vector<8xf32>
    %144 = vector.shape_cast %143 : vector<8xf32> to vector<8x1xf32>
    %cst_60 = arith.constant 3.200000e+01 : f32
    %145 = vector.broadcast %cst_60 : f32 to vector<8x1xf32>
    %146 = arith.divf %144, %145 : vector<8x1xf32>
    %cst_61 = arith.constant 9.99999974E-6 : f32
    %147 = vector.broadcast %cst_61 : f32 to vector<8x1xf32>
    %148 = arith.addf %146, %147 : vector<8x1xf32>
    %149 = math.rsqrt %148 : vector<8x1xf32>
    %150 = vector.broadcast %149 : vector<8x1xf32> to vector<8x32xf32>
    %151 = arith.mulf %141, %150 : vector<8x32xf32>
    %152 = vector.broadcast %2 : vector<1x32xf32> to vector<8x32xf32>
    %153 = arith.mulf %151, %152 : vector<8x32xf32>
    %154 = arith.truncf %153 : vector<8x32xf32> to vector<8x32xbf16>
    %c0_62 = arith.constant 0 : index
    %c0_63 = arith.constant 0 : index
    %155 = vector.load %arg4[%c0_62, %c0_63] : memref<32x128xbf16, #tpu.memory_space<vmem>>, vector<32x128xbf16>
    %cst_64 = arith.constant dense<0.000000e+00> : vector<8x128xf32>
    %156 = tpu.matmul %154, %155, %cst_64 {dimension_numbers = #tpu.dot_dimension_numbers<[1], [0], [0], [1], [0, 0, 1, 1], [], []>} : vector<8x32xbf16>, vector<32x128xbf16>, vector<8x128xf32> -> vector<8x128xf32>
    %157 = vector.extract_strided_slice %156 {offsets = [0, 0], sizes = [8, 64], strides = [1, 1]} : vector<8x128xf32> to vector<8x64xf32>
    %158 = vector.extract_strided_slice %156 {offsets = [0, 64], sizes = [8, 64], strides = [1, 1]} : vector<8x128xf32> to vector<8x64xf32>
    %159 = arith.negf %157 : vector<8x64xf32>
    %160 = math.exp %159 : vector<8x64xf32>
    %cst_65 = arith.constant 1.000000e+00 : f32
    %161 = vector.broadcast %cst_65 : f32 to vector<8x64xf32>
    %162 = arith.addf %161, %160 : vector<8x64xf32>
    %163 = arith.divf %161, %162 : vector<8x64xf32>
    %164 = arith.mulf %157, %163 : vector<8x64xf32>
    %165 = arith.mulf %164, %158 : vector<8x64xf32>
    %166 = arith.truncf %165 : vector<8x64xf32> to vector<8x64xbf16>
    %c0_66 = arith.constant 0 : index
    %c0_67 = arith.constant 0 : index
    %167 = vector.load %arg5[%c0_66, %c0_67] : memref<64x32xbf16, #tpu.memory_space<vmem>>, vector<64x32xbf16>
    %cst_68 = arith.constant dense<0.000000e+00> : vector<8x32xf32>
    %168 = tpu.matmul %166, %167, %cst_68 {dimension_numbers = #tpu.dot_dimension_numbers<[1], [0], [0], [1], [0, 0, 1, 1], [], []>} : vector<8x64xbf16>, vector<64x32xbf16>, vector<8x32xf32> -> vector<8x32xf32>
    %169 = arith.addf %168, %141 : vector<8x32xf32>
    %c0_69 = arith.constant 0 : index
    %c0_70 = arith.constant 0 : index
    %170 = vector.load %arg10[%c0_69, %c0_70] : memref<8x32xf32, #tpu.memory_space<vmem>>, vector<8x32xf32>
    tpu.vector_store %arg10[%c0_69, %c0_70], %169 {strides = array<i32>} : memref<8x32xf32, #tpu.memory_space<vmem>>, vector<8x32xf32>,
    return
  }
  func.func @transform_0(%arg0: i32) -> (i32, i32) {
    %c0_i32 = arith.constant 0 : i32
    %c0_i32_0 = arith.constant 0 : i32
    return %arg0, %c0_i32 : i32, i32
  }
  func.func @transform_1(%arg0: i32) -> (i32, i32) {
    %c0_i32 = arith.constant 0 : i32
    %c0_i32_0 = arith.constant 0 : i32
    %c0_i32_1 = arith.constant 0 : i32
    return %c0_i32, %c0_i32_0 : i32, i32
  }
  func.func @transform_2(%arg0: i32) -> (i32, i32, i32) {
    %c0_i32 = arith.constant 0 : i32
    %c0_i32_0 = arith.constant 0 : i32
    %c0_i32_1 = arith.constant 0 : i32
    %c0_i32_2 = arith.constant 0 : i32
    return %c0_i32, %c0_i32_0, %c0_i32_1 : i32, i32, i32
  }
  func.func @transform_3(%arg0: i32) -> (i32, i32) {
    %c0_i32 = arith.constant 0 : i32
    %c0_i32_0 = arith.constant 0 : i32
    %c0_i32_1 = arith.constant 0 : i32
    return %c0_i32, %c0_i32_0 : i32, i32
  }
  func.func @transform_4(%arg0: i32) -> (i32, i32) {
    %c0_i32 = arith.constant 0 : i32
    %c0_i32_0 = arith.constant 0 : i32
    %c0_i32_1 = arith.constant 0 : i32
    return %c0_i32, %c0_i32_0 : i32, i32
  }
  func.func @transform_5(%arg0: i32) -> (i32, i32) {
    %c0_i32 = arith.constant 0 : i32
    %c0_i32_0 = arith.constant 0 : i32
    %c0_i32_1 = arith.constant 0 : i32
    return %c0_i32, %c0_i32_0 : i32, i32
  }
  func.func @transform_6(%arg0: i32) -> (i32, i32) {
    %c0_i32 = arith.constant 0 : i32
    %c0_i32_0 = arith.constant 0 : i32
    %c0_i32_1 = arith.constant 0 : i32
    return %c0_i32, %c0_i32_0 : i32, i32
  }
  func.func @transform_7(%arg0: i32) -> (i32, i32) {
    %c0_i32 = arith.constant 0 : i32
    %c0_i32_0 = arith.constant 0 : i32
    %c0_i32_1 = arith.constant 0 : i32
    return %c0_i32, %c0_i32_0 : i32, i32
  }
  func.func @transform_8(%arg0: i32) -> (i32, i32) {
    %c0_i32 = arith.constant 0 : i32
    %c0_i32_0 = arith.constant 0 : i32
    %c0_i32_1 = arith.constant 0 : i32
    return %c0_i32, %c0_i32_0 : i32, i32
  }
  func.func @transform_9(%arg0: i32) -> (i32, i32) {
    %c0_i32 = arith.constant 0 : i32
    %c0_i32_0 = arith.constant 0 : i32
    return %arg0, %c0_i32 : i32, i32
  }
}

</mosaic_0001>

<llo_original>
// kernel: tpu_custom_call.1
$region0: #{tpu_custom_call.1}
  #allocation0 [shape = 'u32[]', space=smem, size = 0x4, offset = 0x4, fixed_abs, tag = 'smem constant byte address 0x4 - core index']
  #allocation1 [shape = 'u32[144,128]{1,0:T(1,128)}', space=vmem, size = 0x12000, scoped, tag = 'internal scratch']
  #allocation2 [shape = 'f32[4,8,8]{2,1,0:T(8,128)}', space=vmem, size = 0x4000, scoped, tag = 'scratch operand']
  #allocation3 [shape = 'f32[4,8,8]{2,1,0:T(8,128)}', space=vmem, size = 0x4000, scoped, tag = 'scratch operand']
  #allocation4 [shape = 'f32[4,8,8]{2,1,0:T(8,128)}', space=vmem, size = 0x4000, scoped, tag = 'scratch operand']
  %s0 = inlined_call_operand.vmem [shape: f32[16,32], index: 0, kind: input, shape index: {}]
  %s1 = inlined_call_operand.vmem [shape: bf16[32,96], index: 1, kind: input, shape index: {}]
  %s2 = inlined_call_operand.vmem [shape: bf16[4,8,32], index: 2, kind: input, shape index: {}]
  %s3 = inlined_call_operand.hbm [shape: bf16[32,128], index: 3, kind: input, shape index: {}]
  %s4 = inlined_call_operand.vmem [shape: bf16[64,32], index: 4, kind: input, shape index: {}]
  %s5 = inlined_call_operand.vmem [shape: f32[1,32], index: 5, kind: input, shape index: {}]
  %s6 = inlined_call_operand.vmem [shape: f32[1,32], index: 6, kind: input, shape index: {}]
  %s7 = inlined_call_operand.vmem [shape: f32[8,8], index: 7, kind: input, shape index: {}]
  %s8 = inlined_call_operand.hbm [shape: f32[8,8], index: 8, kind: input, shape index: {}]
  %s9 = inlined_call_operand.hbm [shape: f32[16,32], index: 9, kind: output, shape index: {}]
  %s10 = sld [smem:[#allocation0]]
  $region84: #{tpu_custom_call.1} parent=0
    _
  %s12 = ssub.s32 1, %s10
  %s13 = scalar_select 0, %s12, %s10
  $region1: #{tpu_custom_call.1} parent=0
    #allocation5 [shape = 'u8[8192]{0}', space=vmem, size = 0x2000, scoped, tag = 'input window, operand 3, single buffered']
    #allocation6 [shape = 's32[2]{0}', space=sflag, size = 0x8, scoped, tag = 'scoped memory for tpu_custom_call.1']
    #allocation7 [shape = 's32[2]{0}', space=sflag, size = 0x8, scoped, tag = 'scoped memory for tpu_custom_call.1']
    #allocation8 [shape = 'u8[4096]{0}', space=vmem, size = 0x1000, scoped, tag = 'input window, operand 8, single buffered']
    #allocation9 [shape = 's32[1]{0}', space=sflag, size = 0x4, scoped, tag = 'scoped memory for tpu_custom_call.1']
    #allocation10 [shape = 'u8[8192]{0}', space=vmem, size = 0x2000, scoped, tag = 'output window, operand 0']
    %14 = vsyncpa [#allocation6], 0
    %15 = vsyncpa [#allocation9], 0
    %16 = vsyncpa [#allocation7], 0
    %s17 = scalar_lea.sflag [#allocation7], 1
    %18 = vsyncpa %s17, 0
    loop: start=0, step=1, limit=4
    $region2: #{tpu_custom_call.1} parent=1 // loop_pre_header
      _
    $region3: #{tpu_custom_call.1} parent=1 // loop_header
      %s20 = sphi 0, %s24
      %p21 = scmp.ge.s32.totalorder %s20, 4
      %s30 = sphi 0, %s32
      %s33 = sphi 0, %s30
      %s34 = sphi 0, %s33
      %s50 = sphi 0, %s34
      %s54 = sphi 0, %s54
      %s56 = sphi 0, %s54
      %s57 = sphi 0, %s56
      %s71 = sphi 0, %s57
      %s75 = sphi 0, %s75
      %s77 = sphi 0, %s75
      %s78 = sphi 0, %s77
      %s92 = sphi 0, %s78
      %s96 = sphi 0, %s96
      %s98 = sphi 0, %s96
      %s99 = sphi 0, %s98
      %s113 = sphi 0, %s99
      %s117 = sphi 0, %s117
      %s119 = sphi 0, %s117
      %s120 = sphi 0, %s119
      %s134 = sphi 0, %s120
      %s138 = sphi 0, %s138
      %s140 = sphi 0, %s138
      %s141 = sphi 0, %s140
      %s155 = sphi 0, %s141
      %s159 = sphi 0, %s159
      %s161 = sphi 0, %s159
      %s162 = sphi 0, %s161
      %s176 = sphi 0, %s162
      %s180 = sphi 0, %s180
      %s182 = sphi 0, %s180
      %s183 = sphi 0, %s182
      %s197 = sphi 0, %s183
      %s201 = sphi 0, %s201
      %s203 = sphi 0, %s201
      %s204 = sphi 0, %s203
      %s218 = sphi 0, %s204
      %s224 = sphi 0, %s226
      %s227 = sphi 0, %s224
      %s228 = sphi 0, %s227
      %s244 = sphi 0, %s228
    $region4: #{tpu_custom_call.1} parent=1 // loop_header_branch
      %23 = sbr.rel (%p21) target = $region8
    $region5: #{tpu_custom_call.1} parent=1 // loop_body
      %s25 = ssub.s32 %s20, 1
      %s26 = ssub.s32 %s20, 2
      %s27 = sadd.s32 %s20, 1
      %s28 = ssub.s32 %s20, %s27
      %p29 = scmp.eq.s32.totalorder %s28, 0
      %s31 = sadd.s32 %s30, 1
      %s32 = scalar_select %p29, %s30, %s31
      %p35 = pneg %p29
      %p36 = scmp.eq.s32.totalorder %s20, 1
      %p37 = por %p35, %p36
      %p38 = scmp.ne.s32.totalorder %s30, %s33
      %p39 = scmp.eq.s32.totalorder %s20, 0
      %p40 = por %p38, %p39
      %p41 = scmp.ne.s32.totalorder %s30, %s33
      %p42 = scmp.eq.s32.totalorder %s25, 1
      %p43 = por %p41, %p42
      %p44 = scmp.ne.s32.totalorder %s33, %s34
      %p45 = scmp.eq.s32.totalorder %s25, 0
      %p46 = por %p44, %p45
      %p47 = scmp.ne.s32.totalorder %s33, %s34
      %p48 = scmp.eq.s32.totalorder %s26, 1
      %p49 = por %p47, %p48
      %p51 = scmp.ne.s32.totalorder %s34, %s50
      %p52 = scmp.eq.s32.totalorder %s26, 0
      %p53 = por %p51, %p52
      %s55 = sadd.s32 %s54, 1
      %p58 = scmp.eq.s32.totalorder %s20, 1
      %p59 = scmp.ne.s32.totalorder %s54, %s56
      %p60 = scmp.eq.s32.totalorder %s20, 0
      %p61 = por %p59, %p60
      %p62 = scmp.ne.s32.totalorder %s54, %s56
      %p63 = scmp.eq.s32.totalorder %s25, 1
      %p64 = por %p62, %p63
      %p65 = scmp.ne.s32.totalorder %s56, %s57
      %p66 = scmp.eq.s32.totalorder %s25, 0
      %p67 = por %p65, %p66
      %p68 = scmp.ne.s32.totalorder %s56, %s57
      %p69 = scmp.eq.s32.totalorder %s26, 1
      %p70 = por %p68, %p69
      %p72 = scmp.ne.s32.totalorder %s57, %s71
      %p73 = scmp.eq.s32.totalorder %s26, 0
      %p74 = por %p72, %p73
      %s76 = sadd.s32 %s75, 1
      %p79 = scmp.eq.s32.totalorder %s20, 1
      %p80 = scmp.ne.s32.totalorder %s75, %s77
      %p81 = scmp.eq.s32.totalorder %s20, 0
      %p82 = por %p80, %p81
      %p83 = scmp.ne.s32.totalorder %s75, %s77
      %p84 = scmp.eq.s32.totalorder %s25, 1
      %p85 = por %p83, %p84
      %p86 = scmp.ne.s32.totalorder %s77, %s78
      %p87 = scmp.eq.s32.totalorder %s25, 0
      %p88 = por %p86, %p87
      %p89 = scmp.ne.s32.totalorder %s77, %s78
      %p90 = scmp.eq.s32.totalorder %s26, 1
      %p91 = por %p89, %p90
      %p93 = scmp.ne.s32.totalorder %s78, %s92
      %p94 = scmp.eq.s32.totalorder %s26, 0
      %p95 = por %p93, %p94
      %s97 = sadd.s32 %s96, 1
      %p100 = scmp.eq.s32.totalorder %s20, 1
      %p101 = scmp.ne.s32.totalorder %s96, %s98
      %p102 = scmp.eq.s32.totalorder %s20, 0
      %p103 = por %p101, %p102
      %p104 = scmp.ne.s32.totalorder %s96, %s98
      %p105 = scmp.eq.s32.totalorder %s25, 1
      %p106 = por %p104, %p105
      %p107 = scmp.ne.s32.totalorder %s98, %s99
      %p108 = scmp.eq.s32.totalorder %s25, 0
      %p109 = por %p107, %p108
      %p110 = scmp.ne.s32.totalorder %s98, %s99
      %p111 = scmp.eq.s32.totalorder %s26, 1
      %p112 = por %p110, %p111
      %p114 = scmp.ne.s32.totalorder %s99, %s113
      %p115 = scmp.eq.s32.totalorder %s26, 0
      %p116 = por %p114, %p115
      %s118 = sadd.s32 %s117, 1
      %p121 = scmp.eq.s32.totalorder %s20, 1
      %p122 = scmp.ne.s32.totalorder %s117, %s119
      %p123 = scmp.eq.s32.totalorder %s20, 0
      %p124 = por %p122, %p123
      %p125 = scmp.ne.s32.totalorder %s117, %s119
      %p126 = scmp.eq.s32.totalorder %s25, 1
      %p127 = por %p125, %p126
      %p128 = scmp.ne.s32.totalorder %s119, %s120
      %p129 = scmp.eq.s32.totalorder %s25, 0
      %p130 = por %p128, %p129
      %p131 = scmp.ne.s32.totalorder %s119, %s120
      %p132 = scmp.eq.s32.totalorder %s26, 1
      %p133 = por %p131, %p132
      %p135 = scmp.ne.s32.totalorder %s120, %s134
      %p136 = scmp.eq.s32.totalorder %s26, 0
      %p137 = por %p135, %p136
      %s139 = sadd.s32 %s138, 1
      %p142 = scmp.eq.s32.totalorder %s20, 1
      %p143 = scmp.ne.s32.totalorder %s138, %s140
      %p144 = scmp.eq.s32.totalorder %s20, 0
      %p145 = por %p143, %p144
      %p146 = scmp.ne.s32.totalorder %s138, %s140
      %p147 = scmp.eq.s32.totalorder %s25, 1
      %p148 = por %p146, %p147
      %p149 = scmp.ne.s32.totalorder %s140, %s141
      %p150 = scmp.eq.s32.totalorder %s25, 0
      %p151 = por %p149, %p150
      %p152 = scmp.ne.s32.totalorder %s140, %s141
      %p153 = scmp.eq.s32.totalorder %s26, 1
      %p154 = por %p152, %p153
      %p156 = scmp.ne.s32.totalorder %s141, %s155
      %p157 = scmp.eq.s32.totalorder %s26, 0
      %p158 = por %p156, %p157
      %s160 = sadd.s32 %s159, 1
      %p163 = scmp.eq.s32.totalorder %s20, 1
      %p164 = scmp.ne.s32.totalorder %s159, %s161
      %p165 = scmp.eq.s32.totalorder %s20, 0
      %p166 = por %p164, %p165
      %p167 = scmp.ne.s32.totalorder %s159, %s161
      %p168 = scmp.eq.s32.totalorder %s25, 1
      %p169 = por %p167, %p168
      %p170 = scmp.ne.s32.totalorder %s161, %s162
      %p171 = scmp.eq.s32.totalorder %s25, 0
      %p172 = por %p170, %p171
      %p173 = scmp.ne.s32.totalorder %s161, %s162
      %p174 = scmp.eq.s32.totalorder %s26, 1
      %p175 = por %p173, %p174
      %p177 = scmp.ne.s32.totalorder %s162, %s176
      %p178 = scmp.eq.s32.totalorder %s26, 0
      %p179 = por %p177, %p178
      %s181 = sadd.s32 %s180, 1
      %p184 = scmp.eq.s32.totalorder %s20, 1
      %p185 = scmp.ne.s32.totalorder %s180, %s182
      %p186 = scmp.eq.s32.totalorder %s20, 0
      %p187 = por %p185, %p186
      %p188 = scmp.ne.s32.totalorder %s180, %s182
      %p189 = scmp.eq.s32.totalorder %s25, 1
      %p190 = por %p188, %p189
      %p191 = scmp.ne.s32.totalorder %s182, %s183
      %p192 = scmp.eq.s32.totalorder %s25, 0
      %p193 = por %p191, %p192
      %p194 = scmp.ne.s32.totalorder %s182, %s183
      %p195 = scmp.eq.s32.totalorder %s26, 1
      %p196 = por %p194, %p195
      %p198 = scmp.ne.s32.totalorder %s183, %s197
      %p199 = scmp.eq.s32.totalorder %s26, 0
      %p200 = por %p198, %p199
      %s202 = sadd.s32 %s201, 1
      %p205 = scmp.eq.s32.totalorder %s20, 1
      %p206 = scmp.ne.s32.totalorder %s201, %s203
      %p207 = scmp.eq.s32.totalorder %s20, 0
      %p208 = por %p206, %p207
      %p209 = scmp.ne.s32.totalorder %s201, %s203
      %p210 = scmp.eq.s32.totalorder %s25, 1
      %p211 = por %p209, %p210
      %p212 = scmp.ne.s32.totalorder %s203, %s204
      %p213 = scmp.eq.s32.totalorder %s25, 0
      %p214 = por %p212, %p213
      %p215 = scmp.ne.s32.totalorder %s203, %s204
      %p216 = scmp.eq.s32.totalorder %s26, 1
      %p217 = por %p215, %p216
      %p219 = scmp.ne.s32.totalorder %s204, %s218
      %p220 = scmp.eq.s32.totalorder %s26, 0
      %p221 = por %p219, %p220
      %s222 = ssub.s32 %s20, %s27
      %p223 = scmp.eq.s32.totalorder %s222, 0
      %s225 = sadd.s32 %s224, 1
      %s226 = scalar_select %p223, %s224, %s225
      %p229 = pneg %p223
      %p230 = scmp.eq.s32.totalorder %s20, 1
      %p231 = por %p229, %p230
      %p232 = scmp.ne.s32.totalorder %s224, %s227
      %p233 = scmp.eq.s32.totalorder %s20, 0
      %p234 = por %p232, %p233
      %p235 = scmp.ne.s32.totalorder %s224, %s227
      %p236 = scmp.eq.s32.totalorder %s25, 1
      %p237 = por %p235, %p236
      %p238 = scmp.ne.s32.totalorder %s227, %s228
      %p239 = scmp.eq.s32.totalorder %s25, 0
      %p240 = por %p238, %p239
      %p241 = scmp.ne.s32.totalorder %s227, %s228
      %p242 = scmp.eq.s32.totalorder %s26, 1
      %p243 = por %p241, %p242
      %p245 = scmp.ne.s32.totalorder %s228, %s244
      %p246 = scmp.eq.s32.totalorder %s26, 0
      %p247 = por %p245, %p246
      %p248 = scmp.le.s32.totalorder 1, %s20
      %p249 = scmp.lt.s32.totalorder %s20, 3
      %p250 = pnand %p248, %p249
      %p251 = pneg %p250
      // Predicated region
      $region9: #{tpu_custom_call.1} parent=5 // pred_check
        _
      $region10: #{tpu_custom_call.1} parent=5 // pred_check_branch
        %253 = sbr.rel (%p250) target = $region12
      $region11: #{tpu_custom_call.1} parent=5 // pred_region
        %s254 = ssub.s32 %s20, 1
        // Predicated region
        $region13: #{tpu_custom_call.1} parent=11 // pred_check
          %p255 = pneg %p67
        $region14: #{tpu_custom_call.1} parent=11 // pred_check_branch
          %257 = sbr.rel (%p255) target = $region16
        $region15: #{tpu_custom_call.1} parent=11 // pred_region
          _
        $region16: #{tpu_custom_call.1} parent=11 // pred_fallthru
          _
        // Predicated region
        $region17: #{tpu_custom_call.1} parent=11 // pred_check
          %p258 = pneg %p88
        $region18: #{tpu_custom_call.1} parent=11 // pred_check_branch
          %260 = sbr.rel (%p258) target = $region20
        $region19: #{tpu_custom_call.1} parent=11 // pred_region
          _
        $region20: #{tpu_custom_call.1} parent=11 // pred_fallthru
          _
        // Predicated region
        $region21: #{tpu_custom_call.1} parent=11 // pred_check
          %p261 = pneg %p109
        $region22: #{tpu_custom_call.1} parent=11 // pred_check_branch
          %263 = sbr.rel (%p261) target = $region24
        $region23: #{tpu_custom_call.1} parent=11 // pred_region
          %s265 = ssub.s32 256, 256
          %266 = vsyncadd [#allocation6], %s265
          %s267 = sshll.u32 [#allocation5], 4
          %s268 = int_to_ptr.vmem [resolvable:$true] %s267
          %273 = dma.hbm_to_vmem [thread:$0]  %s3, 256, %s268, [#allocation6], 64, 64, 4
        $region24: #{tpu_custom_call.1} parent=11 // pred_fallthru
          _
        // Predicated region
        $region25: #{tpu_custom_call.1} parent=11 // pred_check
          %p274 = pneg %p130
        $region26: #{tpu_custom_call.1} parent=11 // pred_check_branch
          %276 = sbr.rel (%p274) target = $region28
        $region27: #{tpu_custom_call.1} parent=11 // pred_region
          _
        $region28: #{tpu_custom_call.1} parent=11 // pred_fallthru
          _
        // Predicated region
        $region29: #{tpu_custom_call.1} parent=11 // pred_check
          %p277 = pneg %p151
        $region30: #{tpu_custom_call.1} parent=11 // pred_check_branch
          %279 = sbr.rel (%p277) target = $region32
        $region31: #{tpu_custom_call.1} parent=11 // pred_region
          _
        $region32: #{tpu_custom_call.1} parent=11 // pred_fallthru
          _
        // Predicated region
        $region33: #{tpu_custom_call.1} parent=11 // pred_check
          %p280 = pneg %p172
        $region34: #{tpu_custom_call.1} parent=11 // pred_check_branch
          %282 = sbr.rel (%p280) target = $region36
        $region35: #{tpu_custom_call.1} parent=11 // pred_region
          _
        $region36: #{tpu_custom_call.1} parent=11 // pred_fallthru
          _
        // Predicated region
        $region37: #{tpu_custom_call.1} parent=11 // pred_check
          %p283 = pneg %p193
        $region38: #{tpu_custom_call.1} parent=11 // pred_check_branch
          %285 = sbr.rel (%p283) target = $region40
        $region39: #{tpu_custom_call.1} parent=11 // pred_region
          _
        $region40: #{tpu_custom_call.1} parent=11 // pred_fallthru
          _
        // Predicated region
        $region41: #{tpu_custom_call.1} parent=11 // pred_check
          %p286 = pneg %p214
        $region42: #{tpu_custom_call.1} parent=11 // pred_check_branch
          %288 = sbr.rel (%p286) target = $region44
        $region43: #{tpu_custom_call.1} parent=11 // pred_region
          %s290 = ssub.s32 128, 128
          %291 = vsyncadd [#allocation9], %s290
          %s293 = sshll.u32 [#allocation8], 4
          %s294 = int_to_ptr.vmem [resolvable:$true] %s293
          %296 = dma.hbm_to_vmem [thread:$0]  %s8, 128, %s294, [#allocation9]
        $region44: #{tpu_custom_call.1} parent=11 // pred_fallthru
          _
      $region12: #{tpu_custom_call.1} parent=5 // pred_fallthru
        _
      %p297 = scmp.lt.s32.totalorder %s20, 2
      // Predicated region
      $region45: #{tpu_custom_call.1} parent=5 // pred_check
        %p298 = pneg %p297
      $region46: #{tpu_custom_call.1} parent=5 // pred_check_branch
        %300 = sbr.rel (%p298) target = $region48
      $region47: #{tpu_custom_call.1} parent=5 // pred_region
        // Predicated region
        $region49: #{tpu_custom_call.1} parent=47 // pred_check
          %p301 = pneg %p40
        $region50: #{tpu_custom_call.1} parent=47 // pred_check_branch
          %303 = sbr.rel (%p301) target = $region52
        $region51: #{tpu_custom_call.1} parent=47 // pred_region
          %p304 = scmp.lt.s32.totalorder %s20, 1
          %s305 = scalar_select %p304, %s20, 1
          %s306 = smul.addr %s305, 8
          %s307 = scalar_lea.vmem %s0, %s306
        $region52: #{tpu_custom_call.1} parent=47 // pred_fallthru
          _
      $region48: #{tpu_custom_call.1} parent=5 // pred_fallthru
        _
      %p308 = scmp.le.s32.totalorder 1, %s20
      %p309 = scmp.lt.s32.totalorder %s20, 3
      %p310 = pnand %p308, %p309
      %p311 = pneg %p310
      // Predicated region
      $region53: #{tpu_custom_call.1} parent=5 // pred_check
        _
      $region54: #{tpu_custom_call.1} parent=5 // pred_check_branch
        %313 = sbr.rel (%p310) target = $region56
      $region55: #{tpu_custom_call.1} parent=5 // pred_region
        %s314 = ssub.s32 %s20, 1
        // Predicated region
        $region57: #{tpu_custom_call.1} parent=55 // pred_check
          %p315 = pneg %p109
        $region58: #{tpu_custom_call.1} parent=55 // pred_check_branch
          %317 = sbr.rel (%p315) target = $region60
        $region59: #{tpu_custom_call.1} parent=55 // pred_region
          %318 = dma.done [#allocation6], 256
        $region60: #{tpu_custom_call.1} parent=55 // pred_fallthru
          _
        // Predicated region
        $region61: #{tpu_custom_call.1} parent=55 // pred_check
          %p319 = pneg %p214
        $region62: #{tpu_custom_call.1} parent=55 // pred_check_branch
          %321 = sbr.rel (%p319) target = $region64
        $region63: #{tpu_custom_call.1} parent=55 // pred_region
          %322 = dma.done [#allocation9], 128
        $region64: #{tpu_custom_call.1} parent=55 // pred_fallthru
          _
        %p323 = scmp.lt.s32.totalorder %s25, 1
        %s324 = scalar_select %p323, %s25, 1
        %s325 = smul.addr %s324, 8
        %s326 = scalar_lea.vmem %s0, %s325
        %p327 = pneg %p46
        %p328 = pneg %p43
        %p329 = pneg %p67
        %p330 = pneg %p64
        %p331 = pneg %p88
        %p332 = pneg %p85
        %p333 = pneg %p109
        %p334 = pneg %p106
        %p335 = pneg %p130
        %p336 = pneg %p127
        %p337 = pneg %p151
        %p338 = pneg %p148
        %p339 = pneg %p172
        %p340 = pneg %p169
        %p341 = pneg %p193
        %p342 = pneg %p190
        %p343 = pneg %p214
        %p344 = pneg %p211
        %p345 = pneg %p240
        %p346 = pneg %p237
        %s347 = sand.u32 %s227, 1
        %s348 = scalar_lea.sflag [#allocation7], %s347
        %s349 = sand.u32 %s227, 1
        %s350 = smul.addr %s349, 8
        %s351 = scalar_lea.vmem [#allocation10], %s350
        %p352 = scmp.lt.s32.totalorder %s25, 1
        %s353 = scalar_select %p352, %s25, 1
        %s354 = smul.addr %s353, 8
        %s355 = scalar_lea.vmem %s0, %s354
        %v357 = vld [vmem:[%s355] sm:$0xff]
        %v358 = vld [vmem:[%s5] sm:$0x1]
        %v359 = vld [vmem:[%s6] sm:$0x1]
        %v360 = vld [vmem:[%s7] sm:$0xff]
        %v361 = vld [vmem:[#allocation8] sm:$0xff]
        %v362 = vmul.f32 %v357, %v357
        %vm363 = vcmask 261120
        %v364 = vsel %vm363, %v362, 0.0
        %365 = vadd.xlane.f32.xlu0 %v364
        %v366 = vpop.xlane.xlu0 %365
        %v367 = vrcp.pop 32.0
        %v368 = vmul.f32 %v366, %v367
        %v369 = vadd.f32 %v368, 1e-05
        %v370 = vrsqrt.pop %v369
        %v371 = vmul.f32 %v357, %v370
        %v373 = vlaneseq
        %v374 = vshrl.u32 %v373, 7
        %v375 = vsub.s32 0, %v374
        %v376 = vrot.slane %v358, %v375
        %v378 = vmul.f32 %v371, %v376
        %v379 = vpack.c.bf16 %v378, %v378
        %v380 = vld [vmem:[%s1] sm:$0xf]
        %v381 = vld [vmem:[%s1 + $0x4] sm:$0xf]
        %v382 = vld [vmem:[%s1 + $0x8] sm:$0xf]
        %v383 = vld [vmem:[%s1 + $0xc] sm:$0xf]
        %v388 = vunpack.c.l.b16 %v380
        %v389 = vunpack.c.l.b16 %v381
        %v390 = vunpack.c.l.b16 %v382
        %v391 = vunpack.c.l.b16 %v383
        %v392 = vpack.c.b16 %v389, %v388
        %v393 = vpack.c.b16 %v391, %v390
        %v397 = vsel %vm363, %v379, 0
        %399 = vmatprep.subr.bf16.mxu0 0
        %400 = vmatpush1.bf16.msra.mxu0 0
        %401 = vmatprep.subr.bf16.mxu0 0
        %402 = vmatpush1.bf16.msra.mxu0 0
        %403 = vmatprep.subr.bf16.mxu0 0
        %404 = vmatpush1.bf16.msra.mxu0 0
        %405 = vmatprep.subr.bf16.mxu0 0
        %406 = vmatpush1.bf16.msra.mxu0 0
        %407 = vmatprep.subr.bf16.mxu0 0
        %408 = vmatpush1.bf16.msra.mxu0 0
        %409 = vmatprep.subr.bf16.mxu0 0
        %410 = vmatpush1.bf16.msra.mxu0 0
        %411 = vmatprep.subr.bf16.mxu0 0
        %412 = vmatpush1.bf16.msra.mxu0 %v393
        %413 = vmatprep.subr.bf16.mxu0 0
        %414 = vmatpush1.bf16.msra.mxu0 %v392
        %415 = vmatprep.subr.bf16.mxu0 0
        %416 = vmatpush2.bf16.msra.mxu0 0
        %417 = vmatprep.subr.bf16.mxu0 0
        %418 = vmatpush2.bf16.msra.mxu0 0
        %419 = vmatprep.subr.bf16.mxu0 0
        %420 = vmatpush2.bf16.msra.mxu0 0
        %421 = vmatprep.subr.bf16.mxu0 0
        %422 = vmatpush2.bf16.msra.mxu0 0
        %423 = vmatprep.subr.bf16.mxu0 0
        %424 = vmatpush2.bf16.msra.mxu0 0
        %425 = vmatprep.subr.bf16.mxu0 0
        %426 = vmatpush2.bf16.msra.mxu0 0
        %427 = vmatprep.subr.bf16.mxu0 0
        %428 = vmatpush2.bf16.msra.mxu0 0
        %429 = vmatprep.subr.bf16.mxu0 0
        %430 = vmatpush2.bf16.msra.mxu0 0
        %431 = vmatprep.mubr.bf16.mxu0 0
        %432 = vmatmul.mubr.bf16.gmra.mxu0 %v397
        %v433 = vpop.f32.mrf.mxu0
        %v434 = vadd.f32 0.0, %v433
        %v435 = vpop.f32.mrf.mxu0
        %v436 = vpop.f32.mrf.mxu0
        %v437 = vpop.f32.mrf.mxu0
        %438 = vdwg.mxu0
        %v439 = vsub.f32 0.0, %v434
        %441 = vrot.lane.b32.xlu0 %v439, 124
        %v442 = vpop.permute.xlu0 %441
        %445 = vrot.lane.b32.xlu0 %v434, 4
        %v446 = vpop.permute.xlu0 %445
        %vm448 = vcmask 31744
        %v449 = vsel %vm448, %v442, %v446
        %450 = vrot.lane.b32.xlu0 %v439, 92
        %v451 = vpop.permute.xlu0 %450
        %453 = vrot.lane.b32.xlu0 %v434, 100
        %v454 = vpop.permute.xlu0 %453
        %v456 = vsel %vm448, %v451, %v454
        %v457 = vmul.f32 %v434, %v360
        %v458 = vmul.f32 %v449, %v361
        %v459 = vadd.f32 %v457, %v458
        %vm460 = vcmask 64512
        %461 = vst.msk [vmem:[#allocation2] sm:$0xff] %vm460, %v459
        %463 = vrot.lane.b32.xlu0 %v360, 32
        %v464 = vpop.permute.xlu0 %463
        %v466 = vmul.f32 %v434, %v464
        %v467 = vmul.f32 %v456, %v361
        %469 = vrot.lane.b32.xlu0 %v467, 32
        %v470 = vpop.permute.xlu0 %469
        %v472 = vadd.f32 %v466, %v470
        %474 = vrot.lane.b32.xlu0 %v472, 96
        %v475 = vpop.permute.xlu0 %474
        %477 = vst.msk [vmem:[#allocation3] sm:$0xff] %vm460, %v475
        %478 = vrot.lane.b32.xlu0 %v434, 64
        %v479 = vpop.permute.xlu0 %478
        %481 = vst.msk [vmem:[#allocation4] sm:$0xff] %vm460, %v479
        %482 = vrot.lane.b32.xlu0 %v439, 116
        %v483 = vpop.permute.xlu0 %482
        %485 = vrot.lane.b32.xlu0 %v434, 124
        %v486 = vpop.permute.xlu0 %485
        %v488 = vsel %vm448, %v483, %v486
        %489 = vrot.lane.b32.xlu0 %v439, 84
        %v490 = vpop.permute.xlu0 %489
        %492 = vrot.lane.b32.xlu0 %v434, 92
        %v493 = vpop.permute.xlu0 %492
        %v495 = vsel %vm448, %v490, %v493
        %496 = vrot.lane.b32.xlu0 %v360, 8
        %v497 = vpop.permute.xlu0 %496
        %v499 = vmul.f32 %v434, %v497
        %v500 = vmul.f32 %v488, %v361
        %502 = vrot.lane.b32.xlu0 %v500, 8
        %v503 = vpop.permute.xlu0 %502
        %v505 = vadd.f32 %v499, %v503
        %507 = vrot.lane.b32.xlu0 %v505, 120
        %v508 = vpop.permute.xlu0 %507
        %s510 = scalar_lea.vmem [#allocation2], 8
        %511 = vst.msk [vmem:[%s510] sm:$0xff] %vm460, %v508
        %512 = vrot.lane.b32.xlu0 %v360, 40
        %v513 = vpop.permute.xlu0 %512
        %v515 = vmul.f32 %v434, %v513
        %v516 = vmul.f32 %v495, %v361
        %518 = vrot.lane.b32.xlu0 %v516, 40
        %v519 = vpop.permute.xlu0 %518
        %v521 = vadd.f32 %v515, %v519
        %523 = vrot.lane.b32.xlu0 %v521, 88
        %v524 = vpop.permute.xlu0 %523
        %s526 = scalar_lea.vmem [#allocation3], 8
        %527 = vst.msk [vmem:[%s526] sm:$0xff] %vm460, %v524
        %528 = vrot.lane.b32.xlu0 %v434, 56
        %v529 = vpop.permute.xlu0 %528
        %s531 = scalar_lea.vmem [#allocation4], 8
        %532 = vst.msk [vmem:[%s531] sm:$0xff] %vm460, %v529
        %533 = vrot.lane.b32.xlu0 %v439, 108
        %v534 = vpop.permute.xlu0 %533
        %536 = vrot.lane.b32.xlu0 %v434, 116
        %v537 = vpop.permute.xlu0 %536
        %v539 = vsel %vm448, %v534, %v537
        %540 = vrot.lane.b32.xlu0 %v439, 76
        %v541 = vpop.permute.xlu0 %540
        %543 = vrot.lane.b32.xlu0 %v434, 84
        %v544 = vpop.permute.xlu0 %543
        %v546 = vsel %vm448, %v541, %v544
        %547 = vrot.lane.b32.xlu0 %v360, 16
        %v548 = vpop.permute.xlu0 %547
        %v550 = vmul.f32 %v434, %v548
        %v551 = vmul.f32 %v539, %v361
        %553 = vrot.lane.b32.xlu0 %v551, 16
        %v554 = vpop.permute.xlu0 %553
        %v556 = vadd.f32 %v550, %v554
        %558 = vrot.lane.b32.xlu0 %v556, 112
        %v559 = vpop.permute.xlu0 %558
        %s561 = scalar_lea.vmem [#allocation2], 16
        %562 = vst.msk [vmem:[%s561] sm:$0xff] %vm460, %v559
        %563 = vrot.lane.b32.xlu0 %v360, 48
        %v564 = vpop.permute.xlu0 %563
        %v566 = vmul.f32 %v434, %v564
        %v567 = vmul.f32 %v546, %v361
        %569 = vrot.lane.b32.xlu0 %v567, 48
        %v570 = vpop.permute.xlu0 %569
        %v572 = vadd.f32 %v566, %v570
        %574 = vrot.lane.b32.xlu0 %v572, 80
        %v575 = vpop.permute.xlu0 %574
        %s577 = scalar_lea.vmem [#allocation3], 16
        %578 = vst.msk [vmem:[%s577] sm:$0xff] %vm460, %v575
        %579 = vrot.lane.b32.xlu0 %v434, 48
        %v580 = vpop.permute.xlu0 %579
        %s582 = scalar_lea.vmem [#allocation4], 16
        %583 = vst.msk [vmem:[%s582] sm:$0xff] %vm460, %v580
        %584 = vrot.lane.b32.xlu0 %v439, 100
        %v585 = vpop.permute.xlu0 %584
        %587 = vrot.lane.b32.xlu0 %v434, 108
        %v588 = vpop.permute.xlu0 %587
        %v590 = vsel %vm448, %v585, %v588
        %591 = vrot.lane.b32.xlu0 %v439, 68
        %v592 = vpop.permute.xlu0 %591
        %594 = vrot.lane.b32.xlu0 %v434, 76
        %v595 = vpop.permute.xlu0 %594
        %v597 = vsel %vm448, %v592, %v595
        %598 = vrot.lane.b32.xlu0 %v360, 24
        %v599 = vpop.permute.xlu0 %598
        %v601 = vmul.f32 %v434, %v599
        %v602 = vmul.f32 %v590, %v361
        %604 = vrot.lane.b32.xlu0 %v602, 24
        %v605 = vpop.permute.xlu0 %604
        %v607 = vadd.f32 %v601, %v605
        %609 = vrot.lane.b32.xlu0 %v607, 104
        %v610 = vpop.permute.xlu0 %609
        %s612 = scalar_lea.vmem [#allocation2], 24
        %613 = vst.msk [vmem:[%s612] sm:$0xff] %vm460, %v610
        %614 = vrot.lane.b32.xlu0 %v360, 56
        %v615 = vpop.permute.xlu0 %614
        %v617 = vmul.f32 %v434, %v615
        %v618 = vmul.f32 %v597, %v361
        %620 = vrot.lane.b32.xlu0 %v618, 56
        %v621 = vpop.permute.xlu0 %620
        %v623 = vadd.f32 %v617, %v621
        %625 = vrot.lane.b32.xlu0 %v623, 72
        %v626 = vpop.permute.xlu0 %625
        %s628 = scalar_lea.vmem [#allocation3], 24
        %629 = vst.msk [vmem:[%s628] sm:$0xff] %vm460, %v626
        %630 = vrot.lane.b32.xlu0 %v434, 40
        %v631 = vpop.permute.xlu0 %630
        %s633 = scalar_lea.vmem [#allocation4], 24
        %634 = vst.msk [vmem:[%s633] sm:$0xff] %vm460, %v631
        %v635 = vlaneseq
        %v636 = vshrl.u32 %v635, 7
        %v637 = vlaneseq
        %v638 = vand.u32 %v637, 127
        %vm639 = vcmp.le.s32.totalorder %v638, %v636
        %v640 = vsel %vm639, 0.0, -1e+30
        loop: start=0, step=1, limit=4
        $region65: #{tpu_custom_call.1} parent=55 // loop_pre_header
          _
        $region66: #{tpu_custom_call.1} parent=55 // loop_header
          %s642 = sphi 0, %s646
          %p643 = scmp.ge.s32.totalorder %s642, 4
          %v647 = vphi 0.0, %v813
        $region67: #{tpu_custom_call.1} parent=55 // loop_header_branch
          %645 = sbr.rel (%p643) target = $region71
        $region68: #{tpu_custom_call.1} parent=55 // loop_body
          %s648 = smul.u32 %s642, 8
          %s649 = scalar_lea.vmem [#allocation2], %s648
          %v650 = vld [vmem:[%s649] sm:$0xff]
          %v651 = vpack.c.bf16 %v650, %v650
          %s652 = scalar_lea.vmem [#allocation3], %s648
          %v653 = vld [vmem:[%s652] sm:$0xff]
          %v654 = vpack.c.bf16 %v653, %v653
          %v656 = vsel %vm460, %v651, 0
          %v659 = vsel %vm460, %v654, 0
          %661 = vmatprep.subr.bf16.mxu0 0
          %662 = vmatpush1.bf16.xpose.msra.mxu0 0
          %663 = vmatprep.subr.bf16.mxu0 0
          %664 = vmatpush1.bf16.xpose.msra.mxu0 0
          %665 = vmatprep.subr.bf16.mxu0 0
          %666 = vmatpush1.bf16.xpose.msra.mxu0 0
          %667 = vmatprep.subr.bf16.mxu0 0
          %668 = vmatpush1.bf16.xpose.msra.mxu0 0
          %669 = vmatprep.subr.bf16.mxu0 0
          %670 = vmatpush1.bf16.xpose.msra.mxu0 0
          %671 = vmatprep.subr.bf16.mxu0 0
          %672 = vmatpush1.bf16.xpose.msra.mxu0 0
          %673 = vmatprep.subr.bf16.mxu0 0
          %674 = vmatpush1.bf16.xpose.msra.mxu0 0
          %675 = vmatprep.subr.bf16.mxu0 0
          %676 = vmatpush1.bf16.xpose.msra.mxu0 %v659
          %677 = vmatprep.subr.bf16.mxu0 0
          %678 = vmatpush2.bf16.xpose.msra.mxu0 0
          %679 = vmatprep.subr.bf16.mxu0 0
          %680 = vmatpush2.bf16.xpose.msra.mxu0 0
          %681 = vmatprep.subr.bf16.mxu0 0
          %682 = vmatpush2.bf16.xpose.msra.mxu0 0
          %683 = vmatprep.subr.bf16.mxu0 0
          %684 = vmatpush2.bf16.xpose.msra.mxu0 0
          %685 = vmatprep.subr.bf16.mxu0 0
          %686 = vmatpush2.bf16.xpose.msra.mxu0 0
          %687 = vmatprep.subr.bf16.mxu0 0
          %688 = vmatpush2.bf16.xpose.msra.mxu0 0
          %689 = vmatprep.subr.bf16.mxu0 0
          %690 = vmatpush2.bf16.xpose.msra.mxu0 0
          %691 = vmatprep.subr.bf16.mxu0 0
          %692 = vmatpush2.bf16.xpose.msra.mxu0 0
          %693 = vmatprep.mubr.bf16.mxu0 0
          %694 = vmatmul.mubr.bf16.gmra.mxu0 %v656
          %v695 = vpop.f32.mrf.mxu0
          %v696 = vadd.f32 %v640, %v695
          %v697 = vpop.f32.mrf.mxu0
          %v698 = vpop.f32.mrf.mxu0
          %v699 = vpop.f32.mrf.mxu0
          %700 = vdwg.mxu0
          %v701 = vsel %vm460, %v696, -inf
          %702 = vmax.xlane.f32.xlu0 %v701
          %v703 = vpop.xlane.xlu0 %702
          %v704 = vsub.f32 %v696, %v703
          %v705 = vmul.f32 %v704, 1.442695
          %v706 = vpow.pop %v705
          %v707 = vsel %vm460, %v706, 0.0
          %708 = vadd.xlane.f32.xlu0 %v707
          %v709 = vpop.xlane.xlu0 %708
          %v710 = vrcp.pop %v709
          %v711 = vmul.f32 %v706, %v710
          %v712 = vpack.c.bf16 %v711, %v711
          %s713 = scalar_lea.vmem [#allocation4], %s648
          %v714 = vld [vmem:[%s713] sm:$0xff]
          %v715 = vpack.c.bf16 %v714, %v714
          %v717 = vsel %vm460, %v712, 0
          %vm719 = vcmask 1043456
          %v721 = vsel %vm719, %v715, 0
          %723 = vmatprep.subr.bf16.mxu0 0
          %724 = vmatpush1.bf16.msra.mxu0 0
          %725 = vmatprep.subr.bf16.mxu0 0
          %726 = vmatpush1.bf16.msra.mxu0 0
          %727 = vmatprep.subr.bf16.mxu0 0
          %728 = vmatpush1.bf16.msra.mxu0 0
          %729 = vmatprep.subr.bf16.mxu0 0
          %730 = vmatpush1.bf16.msra.mxu0 0
          %731 = vmatprep.subr.bf16.mxu0 0
          %732 = vmatpush1.bf16.msra.mxu0 0
          %733 = vmatprep.subr.bf16.mxu0 0
          %734 = vmatpush1.bf16.msra.mxu0 0
          %735 = vmatprep.subr.bf16.mxu0 0
          %736 = vmatpush1.bf16.msra.mxu0 0
          %737 = vmatprep.subr.bf16.mxu0 0
          %738 = vmatpush1.bf16.msra.mxu0 %v721
          %739 = vmatprep.subr.bf16.mxu0 0
          %740 = vmatpush2.bf16.msra.mxu0 0
          %741 = vmatprep.subr.bf16.mxu0 0
          %742 = vmatpush2.bf16.msra.mxu0 0
          %743 = vmatprep.subr.bf16.mxu0 0
          %744 = vmatpush2.bf16.msra.mxu0 0
          %745 = vmatprep.subr.bf16.mxu0 0
          %746 = vmatpush2.bf16.msra.mxu0 0
          %747 = vmatprep.subr.bf16.mxu0 0
          %748 = vmatpush2.bf16.msra.mxu0 0
          %749 = vmatprep.subr.bf16.mxu0 0
          %750 = vmatpush2.bf16.msra.mxu0 0
          %751 = vmatprep.subr.bf16.mxu0 0
          %752 = vmatpush2.bf16.msra.mxu0 0
          %753 = vmatprep.subr.bf16.mxu0 0
          %754 = vmatpush2.bf16.msra.mxu0 0
          %755 = vmatprep.mubr.bf16.mxu0 0
          %756 = vmatmul.mubr.bf16.gmra.mxu0 %v717
          %v757 = vpop.f32.mrf.mxu0
          %v758 = vadd.f32 0.0, %v757
          %v759 = vpop.f32.mrf.mxu0
          %v760 = vpop.f32.mrf.mxu0
          %v761 = vpop.f32.mrf.mxu0
          %762 = vdwg.mxu0
          %v763 = vpack.c.bf16 %v758, %v758
          %s764 = smul.addr %s642, 4
          %s765 = scalar_lea.vmem %s2, %s764
          %v766 = vld [vmem:[%s765] sm:$0xf]
          %v768 = vsel %vm460, %v763, 0
          %v771 = vsel %vm719, %v766, 0
          %773 = vmatprep.subr.bf16.mxu0 0
          %774 = vmatpush1.bf16.msra.mxu0 0
          %775 = vmatprep.subr.bf16.mxu0 0
          %776 = vmatpush1.bf16.msra.mxu0 0
          %777 = vmatprep.subr.bf16.mxu0 0
          %778 = vmatpush1.bf16.msra.mxu0 0
          %779 = vmatprep.subr.bf16.mxu0 0
          %780 = vmatpush1.bf16.msra.mxu0 0
          %781 = vmatprep.subr.bf16.mxu0 0
          %782 = vmatpush1.bf16.msra.mxu0 0
          %783 = vmatprep.subr.bf16.mxu0 0
          %784 = vmatpush1.bf16.msra.mxu0 0
          %785 = vmatprep.subr.bf16.mxu0 0
          %786 = vmatpush1.bf16.msra.mxu0 0
          %787 = vmatprep.subr.bf16.mxu0 0
          %788 = vmatpush1.bf16.msra.mxu0 %v771
          %789 = vmatprep.subr.bf16.mxu0 0
          %790 = vmatpush2.bf16.msra.mxu0 0
          %791 = vmatprep.subr.bf16.mxu0 0
          %792 = vmatpush2.bf16.msra.mxu0 0
          %793 = vmatprep.subr.bf16.mxu0 0
          %794 = vmatpush2.bf16.msra.mxu0 0
          %795 = vmatprep.subr.bf16.mxu0 0
          %796 = vmatpush2.bf16.msra.mxu0 0
          %797 = vmatprep.subr.bf16.mxu0 0
          %798 = vmatpush2.bf16.msra.mxu0 0
          %799 = vmatprep.subr.bf16.mxu0 0
          %800 = vmatpush2.bf16.msra.mxu0 0
          %801 = vmatprep.subr.bf16.mxu0 0
          %802 = vmatpush2.bf16.msra.mxu0 0
          %803 = vmatprep.subr.bf16.mxu0 0
          %804 = vmatpush2.bf16.msra.mxu0 0
          %805 = vmatprep.mubr.bf16.mxu0 0
          %806 = vmatmul.mubr.bf16.gmra.mxu0 %v768
          %v807 = vpop.f32.mrf.mxu0
          %v808 = vadd.f32 0.0, %v807
          %v809 = vpop.f32.mrf.mxu0
          %v810 = vpop.f32.mrf.mxu0
          %v811 = vpop.f32.mrf.mxu0
          %812 = vdwg.mxu0
          %v813 = vadd.f32 %v647, %v808
        $region69: #{tpu_custom_call.1} parent=55 // loop_footer
          %s646 = sadd.s32 1, %s642
        $region70: #{tpu_custom_call.1} parent=55 // loop_footer_branch
          %641 = sbr.rel target = $region66
        $region71: #{tpu_custom_call.1} parent=55 // loop_exit
          _
        %v814 = vadd.f32 %v647, %v357
        %v815 = vmul.f32 %v814, %v814
        %v816 = vsel %vm363, %v815, 0.0
        %817 = vadd.xlane.f32.xlu0 %v816
        %v818 = vpop.xlane.xlu0 %817
        %v819 = vmul.f32 %v818, %v367
        %v820 = vadd.f32 %v819, 1e-05
        %v821 = vrsqrt.pop %v820
        %v822 = vmul.f32 %v814, %v821
        %v824 = vlaneseq
        %v825 = vshrl.u32 %v824, 7
        %v826 = vsub.s32 0, %v825
        %v827 = vrot.slane %v359, %v826
        %v829 = vmul.f32 %v822, %v827
        %v830 = vpack.c.bf16 %v829, %v829
        %v831 = vld [vmem:[#allocation5] sm:$0xf]
        %v832 = vld [vmem:[#allocation5 + $0x4] sm:$0xf]
        %v833 = vld [vmem:[#allocation5 + $0x8] sm:$0xf]
        %v834 = vld [vmem:[#allocation5 + $0xc] sm:$0xf]
        %v839 = vunpack.c.l.b16 %v831
        %v840 = vunpack.c.l.b16 %v832
        %v841 = vunpack.c.l.b16 %v833
        %v842 = vunpack.c.l.b16 %v834
        %v843 = vpack.c.b16 %v840, %v839
        %v844 = vpack.c.b16 %v842, %v841
        %v848 = vsel %vm363, %v830, 0
        %850 = vmatprep.subr.bf16.mxu0 0
        %851 = vmatpush1.bf16.msra.mxu0 0
        %852 = vmatprep.subr.bf16.mxu0 0
        %853 = vmatpush1.bf16.msra.mxu0 0
        %854 = vmatprep.subr.bf16.mxu0 0
        %855 = vmatpush1.bf16.msra.mxu0 0
        %856 = vmatprep.subr.bf16.mxu0 0
        %857 = vmatpush1.bf16.msra.mxu0 0
        %858 = vmatprep.subr.bf16.mxu0 0
        %859 = vmatpush1.bf16.msra.mxu0 0
        %860 = vmatprep.subr.bf16.mxu0 0
        %861 = vmatpush1.bf16.msra.mxu0 0
        %862 = vmatprep.subr.bf16.mxu0 0
        %863 = vmatpush1.bf16.msra.mxu0 %v844
        %864 = vmatprep.subr.bf16.mxu0 0
        %865 = vmatpush1.bf16.msra.mxu0 %v843
        %866 = vmatprep.subr.bf16.mxu0 0
        %867 = vmatpush2.bf16.msra.mxu0 0
        %868 = vmatprep.subr.bf16.mxu0 0
        %869 = vmatpush2.bf16.msra.mxu0 0
        %870 = vmatprep.subr.bf16.mxu0 0
        %871 = vmatpush2.bf16.msra.mxu0 0
        %872 = vmatprep.subr.bf16.mxu0 0
        %873 = vmatpush2.bf16.msra.mxu0 0
        %874 = vmatprep.subr.bf16.mxu0 0
        %875 = vmatpush2.bf16.msra.mxu0 0
        %876 = vmatprep.subr.bf16.mxu0 0
        %877 = vmatpush2.bf16.msra.mxu0 0
        %878 = vmatprep.subr.bf16.mxu0 0
        %879 = vmatpush2.bf16.msra.mxu0 0
        %880 = vmatprep.subr.bf16.mxu0 0
        %881 = vmatpush2.bf16.msra.mxu0 0
        %882 = vmatprep.mubr.bf16.mxu0 0
        %883 = vmatmul.mubr.bf16.gmra.mxu0 %v848
        %v884 = vpop.f32.mrf.mxu0
        %v885 = vadd.f32 0.0, %v884
        %v886 = vpop.f32.mrf.mxu0
        %v887 = vpop.f32.mrf.mxu0
        %v888 = vpop.f32.mrf.mxu0
        %889 = vdwg.mxu0
        %v890 = vxor.u32 %v885, 2147483648
        %v891 = vmul.f32 %v890, 1.442695
        %v892 = vpow.pop %v891
        %v893 = vadd.f32 %v892, 1.0
        %v894 = vrcp.pop %v893
        %v895 = vmul.f32 1.0, %v894
        %v896 = vmul.f32 %v885, %v895
        %898 = vrot.lane.b32.xlu0 %v885, 64
        %v899 = vpop.permute.xlu0 %898
        %v901 = vmul.f32 %v896, %v899
        %v902 = vpack.c.bf16 %v901, %v901
        %v903 = vld [vmem:[%s4] sm:$0xf]
        %v904 = vld [vmem:[%s4 + $0x4] sm:$0xf]
        %v905 = vld [vmem:[%s4 + $0x8] sm:$0xf]
        %v906 = vld [vmem:[%s4 + $0xc] sm:$0xf]
        %v907 = vld [vmem:[%s4 + $0x10] sm:$0xf]
        %v908 = vld [vmem:[%s4 + $0x14] sm:$0xf]
        %v909 = vld [vmem:[%s4 + $0x18] sm:$0xf]
        %v910 = vld [vmem:[%s4 + $0x1c] sm:$0xf]
        %v919 = vunpack.c.l.b16 %v903
        %v920 = vunpack.c.l.b16 %v904
        %v921 = vunpack.c.l.b16 %v905
        %v922 = vunpack.c.l.b16 %v906
        %v923 = vunpack.c.l.b16 %v907
        %v924 = vunpack.c.l.b16 %v908
        %v925 = vunpack.c.l.b16 %v909
        %v926 = vunpack.c.l.b16 %v910
        %v927 = vpack.c.b16 %v920, %v919
        %v928 = vpack.c.b16 %v922, %v921
        %v929 = vpack.c.b16 %v924, %v923
        %v930 = vpack.c.b16 %v926, %v925
        %vm935 = vcmask 523264
        %v937 = vsel %vm935, %v902, 0
        %939 = vmatprep.subr.bf16.mxu0 0
        %940 = vmatpush1.bf16.msra.mxu0 0
        %941 = vmatprep.subr.bf16.mxu0 0
        %942 = vmatpush1.bf16.msra.mxu0 0
        %943 = vmatprep.subr.bf16.mxu0 0
        %944 = vmatpush1.bf16.msra.mxu0 0
        %945 = vmatprep.subr.bf16.mxu0 0
        %946 = vmatpush1.bf16.msra.mxu0 0
        %947 = vmatprep.subr.bf16.mxu0 0
        %948 = vmatpush1.bf16.msra.mxu0 %v930
        %949 = vmatprep.subr.bf16.mxu0 0
        %950 = vmatpush1.bf16.msra.mxu0 %v929
        %951 = vmatprep.subr.bf16.mxu0 0
        %952 = vmatpush1.bf16.msra.mxu0 %v928
        %953 = vmatprep.subr.bf16.mxu0 0
        %954 = vmatpush1.bf16.msra.mxu0 %v927
        %955 = vmatprep.subr.bf16.mxu0 0
        %956 = vmatpush2.bf16.msra.mxu0 0
        %957 = vmatprep.subr.bf16.mxu0 0
        %958 = vmatpush2.bf16.msra.mxu0 0
        %959 = vmatprep.subr.bf16.mxu0 0
        %960 = vmatpush2.bf16.msra.mxu0 0
        %961 = vmatprep.subr.bf16.mxu0 0
        %962 = vmatpush2.bf16.msra.mxu0 0
        %963 = vmatprep.subr.bf16.mxu0 0
        %964 = vmatpush2.bf16.msra.mxu0 0
        %965 = vmatprep.subr.bf16.mxu0 0
        %966 = vmatpush2.bf16.msra.mxu0 0
        %967 = vmatprep.subr.bf16.mxu0 0
        %968 = vmatpush2.bf16.msra.mxu0 0
        %969 = vmatprep.subr.bf16.mxu0 0
        %970 = vmatpush2.bf16.msra.mxu0 0
        %971 = vmatprep.mubr.bf16.mxu0 0
        %972 = vmatmul.mubr.bf16.gmra.mxu0 %v937
        %v973 = vpop.f32.mrf.mxu0
        %v974 = vadd.f32 %v814, %v973
        %v975 = vpop.f32.mrf.mxu0
        %v976 = vpop.f32.mrf.mxu0
        %v977 = vpop.f32.mrf.mxu0
        %978 = vdwg.mxu0
        %979 = vst.msk [vmem:[%s351] sm:$0xff] %vm363, %v974
        %s980 = sand.u32 %s227, 1
        %s981 = scalar_lea.sflag [#allocation7], %s980
        %s982 = sand.u32 %s227, 1
        %s983 = smul.addr %s982, 8
        %s984 = scalar_lea.vmem [#allocation10], %s983
        // Predicated region
        $region72: #{tpu_custom_call.1} parent=55 // pred_check
          %p985 = pneg %p237
        $region73: #{tpu_custom_call.1} parent=55 // pred_check_branch
          %987 = sbr.rel (%p985) target = $region75
        $region74: #{tpu_custom_call.1} parent=55 // pred_region
          %s989 = ssub.s32 128, 128
          %990 = vsyncadd %s981, %s989
          %s991 = smul.addr %s25, 128
          %s992 = scalar_lea.hbm %s9, %s991
          %s994 = sshll.u32 %s984, 4
          %s995 = int_to_ptr.vmem [resolvable:$true] %s994
          %997 = dma.vmem_to_hbm [thread:$0]  %s995, 128, %s992, %s981
        $region75: #{tpu_custom_call.1} parent=55 // pred_fallthru
          _
      $region56: #{tpu_custom_call.1} parent=5 // pred_fallthru
        _
      %p998 = scmp.le.s32.totalorder 2, %s20
      // Predicated region
      $region76: #{tpu_custom_call.1} parent=5 // pred_check
        %p999 = pneg %p998
      $region77: #{tpu_custom_call.1} parent=5 // pred_check_branch
        %1001 = sbr.rel (%p999) target = $region79
      $region78: #{tpu_custom_call.1} parent=5 // pred_region
        %s1002 = ssub.s32 %s20, 2
        // Predicated region
        $region80: #{tpu_custom_call.1} parent=78 // pred_check
          %p1003 = pneg %p243
        $region81: #{tpu_custom_call.1} parent=78 // pred_check_branch
          %1005 = sbr.rel (%p1003) target = $region83
        $region82: #{tpu_custom_call.1} parent=78 // pred_region
          %s1006 = sand.u32 %s228, 1
          %s1007 = scalar_lea.sflag [#allocation7], %s1006
          %s1008 = sand.u32 %s228, 1
          %s1009 = smul.addr %s1008, 8
          %s1010 = scalar_lea.vmem [#allocation10], %s1009
          %1011 = dma.done %s1007, 128
        $region83: #{tpu_custom_call.1} parent=78 // pred_fallthru
          _
      $region79: #{tpu_custom_call.1} parent=5 // pred_fallthru
        _
    $region6: #{tpu_custom_call.1} parent=1 // loop_footer
      %s24 = sadd.s32 1, %s20
    $region7: #{tpu_custom_call.1} parent=1 // loop_footer_branch
      %19 = sbr.rel target = $region3
    $region8: #{tpu_custom_call.1} parent=1 // loop_exit
      _
    %1012 = vsyncpa [#allocation6], 1
    %s1013 = scalar_lea.sflag [#allocation6], 1
    %1014 = vsyncpa %s1013, 1
    %1015 = vsyncpa [#allocation9], 1
    %1016 = vsyncpa [#allocation7], 1
    %s1017 = scalar_lea.sflag [#allocation7], 1
    %1018 = vsyncpa %s1017, 1

</llo_original>
